<compile_context>
chip_gen: v5e
topology: v5e:2x2
jax: 0.10.0
libtpu: 0.0.40
codegen_flags: <defaults>
</compile_context>

<pallas_src>
import functools

import jax
import jax.numpy as jnp
from jax.experimental import pallas as pl
from jax.experimental.pallas import tpu as pltpu

_LANES = 128


def _round_up(x, m):
    return ((x + m - 1) // m) * m


def _conv_bn_act_kernel(x_hbm, w_ref, b_ref, o_ref, x_win, sem, *,
                        taps, tm, act, precise):
    """Fetch halo window, merged-K conv matmul, folded-BN bias + activation.

    x_hbm : (Lx, Cin)        flattened SAME-padded activations, left in HBM
    w_ref : (ks*ks*Cin, Cp)  BN-folded weights, K order = (tap, cin)
    b_ref : (1, Cp)          folded per-channel bias (f32)
    o_ref : (tm, Cp)         lane-dense output tile (compute dtype)
    x_win : (win, Cin)       VMEM scratch holding this tile's input window
    sem   :                  DMA completion semaphore
    """
    win = x_win.shape[0]
    # tm is a multiple of 8, so the window start is sublane-aligned.
    start = pl.multiple_of(pl.program_id(0) * tm, tm & -tm)
    cp = pltpu.make_async_copy(x_hbm.at[pl.ds(start, win), :], x_win, sem)
    cp.start()
    cp.wait()

    # In-register im2col: tap (dy,dx) of the flattened padded input is the
    # row-shifted slice starting at dy*Wv+dx; concatenating the ks*ks slices
    # along K lets ONE MXU matmul do the whole conv accumulation.
    patch = jnp.concatenate([x_win[off:off + tm, :] for off in taps], axis=-1)
    y = jnp.dot(patch, w_ref[...], preferred_element_type=jnp.float32)
    y = y + b_ref[...]                              # folded BatchNorm / conv bias

    if act == "mish":
        # mish(y) = y*tanh(softplus(y)) = y*(1 - 2/((1+e^y)^2 + 1)); clamp the
        # exp so large activations don't drive the denominator to inf/NaN
        # (mish(y) ~= y for y > 20 anyway).
        e = jnp.exp(jnp.minimum(y, 20.0))
        d = (1.0 + e) * (1.0 + e) + 1.0
        inv = (1.0 / d) if precise else pl.reciprocal(d, approx=True)
        y = y * (1.0 - 2.0 * inv)
    elif act == "relu":
        y = jnp.maximum(y, 0.0)
    elif act == "leaky_relu":
        y = jnp.where(y > 0.0, y, 0.1 * y)
    elif act == "selu":
        y = 1.0507009873554805 * jnp.where(
            y > 0.0, y, 1.6732632423543772 * (jnp.exp(jnp.minimum(y, 0.0)) - 1.0))
    elif act in ("identity", "identiy"):            # module's dict spells it 'identiy'
        pass
    else:
        raise ValueError("no activation {}".format(act))

    o_ref[...] = y.astype(o_ref.dtype)


def conv_bn_act(x_nchw, params, *, ks, stride=1, pad="SAME", padding=0,
                use_bn=True, act="mish", eps=1e-5,
                compute_dtype=jnp.bfloat16, out_dtype=None,
                max_tm=256, wp_align=8):
    """Forward pass of ConvBnAct (eval-mode BN folded into weight/bias)."""
    if stride != 1:
        # TODO(synk): stride > 1 is not implemented.
        raise NotImplementedError("only stride=1 is supported")
    if pad == "SAME":
        padding = (ks - 1) // 2
    out_dtype = x_nchw.dtype if out_dtype is None else out_dtype
    precise = jnp.dtype(compute_dtype) == jnp.dtype(jnp.float32)

    w_oihw = params["w"].astype(jnp.float32)          # (Cout, Cin, kh, kw)
    Cout, Cin, _, _ = w_oihw.shape
    if use_bn:
        scale = params["gamma"] / jnp.sqrt(params["var"] + eps)
        bias = params["beta"] - params["mean"] * scale
    else:
        scale = jnp.ones((Cout,), jnp.float32)
        bias = params.get("bias", jnp.zeros((Cout,), jnp.float32))
    w_folded = w_oihw * scale[:, None, None, None]    # fold BN scale into weights

    # (Cout,Cin,kh,kw) -> merged-K (kh*kw*Cin, Cout); K order = (tap, cin) to
    # match the in-kernel patch concatenation.  Pad Cout to a lane-dense
    # multiple of 128 (256 for wide layers -> full-width v6e/v7x MXU passes).
    lane_mult = 256 if Cout >= 256 else _LANES
    Cp = _round_up(max(Cout, _LANES), lane_mult)
    K = ks * ks * Cin
    w2d = jnp.transpose(w_folded, (2, 3, 1, 0)).reshape(K, Cout)
    w2d = jnp.pad(w2d, ((0, 0), (0, Cp - Cout))).astype(compute_dtype)
    bias_p = jnp.pad(bias, (0, Cp - Cout)).reshape(1, Cp).astype(jnp.float32)

    # NCHW -> NHWC in the compute dtype (halves layout-pass + DMA traffic),
    # SAME spatial padding, pad the row stride Wv to a sublane multiple so the
    # dy*Wv tap offsets are aligned, then flatten (N,Hp,Wv) into rows.
    N, _, H, W = x_nchw.shape
    x = jnp.transpose(x_nchw.astype(compute_dtype), (0, 2, 3, 1))
    Hp, Wp = H + 2 * padding, W + 2 * padding
    Wv = _round_up(Wp, wp_align)
    H_out, W_out = Hp - ks + 1, Wp - ks + 1
    xp = jnp.pad(x, ((0, 0), (padding, padding),
                     (padding, padding + (Wv - Wp)), (0, 0)))
    M = N * Hp * Wv
    x_flat = xp.reshape(M, Cin)

    # Conv outputs are computed for every padded-grid position (extras are
    # sliced off below); tap (dy,dx) starts at row dy*Wv + dx.
    taps = tuple(dy * Wv + dx for dy in range(ks) for dx in range(ks))
    max_off = taps[-1]

    # >= 2 parallel M tiles so both v7x TensorCores get work; cap tm so the
    # per-tile f32 epilogue stays comfortably within the vreg file.
    tm = max(8, min(max_tm, _round_up(-(-M // 2), 8)))
    num_m_tiles = -(-M // tm)
    Mpad = num_m_tiles * tm
    win = _round_up(tm + max_off, 8)                  # per-tile halo window rows
    Lx = _round_up(max(M, (num_m_tiles - 1) * tm + win), 8)
    x_flat = jnp.pad(x_flat, ((0, Lx - M), (0, 0)))

    # Explicit VMEM budget: window scratch + single-buffered weights/bias +
    # double-buffered output block + f32 matmul result / epilogue temporaries.
    isz = jnp.dtype(compute_dtype).itemsize
    est = (win * max(Cin, _LANES) * isz
           + K * Cp * isz + Cp * 4
           + 2 * tm * Cp * isz
           + 6 * tm * Cp * 4)
    vmem_limit = int(min(96 * 2 ** 20, max(16 * 2 ** 20, 2 * est)))

    kernel = functools.partial(_conv_bn_act_kernel, taps=taps, tm=tm,
                               act=act, precise=precise)
    out = pl.pallas_call(
        kernel,
        out_shape=jax.ShapeDtypeStruct((Mpad, Cp), compute_dtype),
        grid=(num_m_tiles,),
        in_specs=[
            # x stays in HBM; the kernel DMAs only this tile's halo window.
            pl.BlockSpec(memory_space=pl.ANY),
            # Grid-invariant operands: single-buffered (no wasted 2nd copy).
            pl.BlockSpec((K, Cp), lambda i: (0, 0),
                         pipeline_mode=pl.Buffered(1)),
            pl.BlockSpec((1, Cp), lambda i: (0, 0),
                         pipeline_mode=pl.Buffered(1)),
        ],
        out_specs=pl.BlockSpec((tm, Cp), lambda i: (i, 0)),   # lane-dense stores
        scratch_shapes=[
            pltpu.VMEM((win, Cin), compute_dtype),            # halo window
            pltpu.SemaphoreType.DMA,
        ],
        compiler_params=pltpu.CompilerParams(
            dimension_semantics=("parallel",),
            vmem_limit_bytes=vmem_limit),
    )(x_flat, w2d, bias_p)

    # Drop padded rows / pad channels and return NCHW.
    out = out[:M].reshape(N, Hp, Wv, Cp)[:, :H_out, :W_out, :Cout]
    return jnp.transpose(out, (0, 3, 1, 2)).astype(out_dtype)


def init_params(key, nin, nout, ks):
    """Deterministic synthetic parameters matching ConvBnAct(use_bn=True)."""
    kw, kg, kb, km, kv = jax.random.split(key, 5)
    w = 0.1 * jax.random.normal(kw, (nout, nin, ks, ks), jnp.float32)  # Conv2d weight
    gamma = 1.0 + 0.1 * jax.random.normal(kg, (nout,), jnp.float32)
    beta = 0.1 * jax.random.normal(kb, (nout,), jnp.float32)
    mean = 0.1 * jax.random.normal(km, (nout,), jnp.float32)
    var = 1.0 + 0.1 * jax.random.uniform(kv, (nout,), jnp.float32)
    return dict(w=w, gamma=gamma, beta=beta, mean=mean, var=var)


def _reference(x, params, ks, eps=1e-5):
    """Pure-JAX (XLA) reference: Conv2d + eval BatchNorm + Mish."""
    y = jax.lax.conv_general_dilated(
        x, params["w"], window_strides=(1, 1), padding="SAME",
        dimension_numbers=("NCHW", "OIHW", "NCHW"),
        precision=jax.lax.Precision.HIGHEST)
    scale = params["gamma"] / jnp.sqrt(params["var"] + eps)
    bias = params["beta"] - params["mean"] * scale
    y = y * scale[None, :, None, None] + bias[None, :, None, None]
    return y * jnp.tanh(jax.nn.softplus(y))


if __name__ == "__main__":
    nin, nout, ks = 4, 8, 3
    key = jax.random.PRNGKey(0)
    kx, kp = jax.random.split(key)
    x = jax.random.normal(kx, (2, nin, 16, 16), jnp.float32)   # NCHW, like PyTorch
    params = init_params(kp, nin, nout, ks)

    ref = _reference(x, params, ks)

    # Fast path: bf16 operands, f32 MXU accumulation, bf16 HBM writeback.
    out = jax.block_until_ready(conv_bn_act(x, params, ks=ks, act="mish"))
    assert out.shape == (2, nout, 16, 16), out.shape
    assert out.dtype == jnp.float32
    assert bool(jnp.all(jnp.isfinite(out)))
    err_bf16 = float(jnp.max(jnp.abs(out - ref)))
    assert err_bf16 < 7e-2, "bf16 path max abs err vs reference: {}".format(err_bf16)

    # Tight correctness path: full f32 compute (catches structural bugs such
    # as wrong tap offsets that a loose bf16 tolerance could hide).
    out32 = jax.block_until_ready(
        conv_bn_act(x, params, ks=ks, act="mish", compute_dtype=jnp.float32))
    err_f32 = float(jnp.max(jnp.abs(out32 - ref)))
    assert err_f32 < 1e-2, "f32 path max abs err vs reference: {}".format(err_f32)

    print("KERNEL_OK")
</pallas_src>

<mosaic_0001>
module attributes {stable_mosaic.version = 11 : i64} {
  func.func @_conv_bn_act_kernel(%arg0: i32, %arg1: memref<1080x4xbf16, #tpu.memory_space<any>>, %arg2: memref<36x128xbf16, #tpu.memory_space<vmem>>, %arg3: memref<1x128xf32, #tpu.memory_space<vmem>>, %arg4: memref<256x128xbf16, #tpu.memory_space<vmem>>, %arg5: memref<312x4xbf16, #tpu.memory_space<vmem>>, %arg6: memref<!tpu.dma_semaphore, #tpu.memory_space<semaphore_mem>>) attributes {dimension_semantics = [#tpu.dimension_semantics<parallel>], iteration_bounds = array<i64: 4>, scalar_prefetch = 0 : i64, scratch_operands = 2 : i64, tpu.core_type = #tpu.core_type<tc>, window_params = [{}, {pipeline_mode = #tpu.pipeline_mode<synchronous>, transform_indices = @transform_1, window_bounds = array<i64: 36, 128>}, {pipeline_mode = #tpu.pipeline_mode<synchronous>, transform_indices = @transform_2, window_bounds = array<i64: 1, 128>}, {transform_indices = @transform_3, window_bounds = array<i64: 256, 128>}]} {
    %c256_i32 = arith.constant 256 : i32
    %0 = arith.muli %arg0, %c256_i32 : i32
    %1 = tpu.assume_multiple %0, 256 : i32
    %c0_i32 = arith.constant 0 : i32
    %2 = tpu.memref_slice %arg1[%1, %c0_i32] : memref<1080x4xbf16, #tpu.memory_space<any>> -> memref<312x4xbf16, #tpu.memory_space<any>>
    tpu.enqueue_dma source(%2 : memref<312x4xbf16, #tpu.memory_space<any>>) target(%arg5 : memref<312x4xbf16, #tpu.memory_space<vmem>>) target_semaphore(%arg6 : memref<!tpu.dma_semaphore, #tpu.memory_space<semaphore_mem>>)
    %c0_i32_0 = arith.constant 0 : i32
    %3 = tpu.memref_slice %arg1[%1, %c0_i32_0] : memref<1080x4xbf16, #tpu.memory_space<any>> -> memref<312x4xbf16, #tpu.memory_space<any>>
    tpu.wait_dma2 semaphore(%arg6 : memref<!tpu.dma_semaphore, #tpu.memory_space<semaphore_mem>>) src(%3 : memref<312x4xbf16, #tpu.memory_space<any>>) dst(%arg5 : memref<312x4xbf16, #tpu.memory_space<vmem>>)
    %c0 = arith.constant 0 : index
    %c0_1 = arith.constant 0 : index
    %4 = vector.load %arg5[%c0, %c0_1] : memref<312x4xbf16, #tpu.memory_space<vmem>>, vector<256x4xbf16>
    %c1 = arith.constant 1 : index
    %c0_2 = arith.constant 0 : index
    %5 = vector.load %arg5[%c1, %c0_2] : memref<312x4xbf16, #tpu.memory_space<vmem>>, vector<256x4xbf16>
    %c2 = arith.constant 2 : index
    %c0_3 = arith.constant 0 : index
    %6 = vector.load %arg5[%c2, %c0_3] : memref<312x4xbf16, #tpu.memory_space<vmem>>, vector<256x4xbf16>
    %c24 = arith.constant 24 : index
    %c0_4 = arith.constant 0 : index
    %7 = vector.load %arg5[%c24, %c0_4] : memref<312x4xbf16, #tpu.memory_space<vmem>>, vector<256x4xbf16>
    %c25 = arith.constant 25 : index
    %c0_5 = arith.constant 0 : index
    %8 = vector.load %arg5[%c25, %c0_5] : memref<312x4xbf16, #tpu.memory_space<vmem>>, vector<256x4xbf16>
    %c26 = arith.constant 26 : index
    %c0_6 = arith.constant 0 : index
    %9 = vector.load %arg5[%c26, %c0_6] : memref<312x4xbf16, #tpu.memory_space<vmem>>, vector<256x4xbf16>
    %c48 = arith.constant 48 : index
    %c0_7 = arith.constant 0 : index
    %10 = vector.load %arg5[%c48, %c0_7] : memref<312x4xbf16, #tpu.memory_space<vmem>>, vector<256x4xbf16>
    %c49 = arith.constant 49 : index
    %c0_8 = arith.constant 0 : index
    %11 = vector.load %arg5[%c49, %c0_8] : memref<312x4xbf16, #tpu.memory_space<vmem>>, vector<256x4xbf16>
    %c50 = arith.constant 50 : index
    %c0_9 = arith.constant 0 : index
    %12 = vector.load %arg5[%c50, %c0_9] : memref<312x4xbf16, #tpu.memory_space<vmem>>, vector<256x4xbf16>
    %13 = tpu.concatenate %4, %5, %6, %7, %8, %9, %10, %11, %12 in 1 : vector<256x4xbf16>, vector<256x4xbf16>, vector<256x4xbf16>, vector<256x4xbf16>, vector<256x4xbf16>, vector<256x4xbf16>, vector<256x4xbf16>, vector<256x4xbf16>, vector<256x4xbf16> -> vector<256x36xbf16>
    %c0_10 = arith.constant 0 : index
    %c0_11 = arith.constant 0 : index
    %14 = vector.load %arg2[%c0_10, %c0_11] : memref<36x128xbf16, #tpu.memory_space<vmem>>, vector<36x128xbf16>
    %cst = arith.constant dense<0.000000e+00> : vector<256x128xf32>
    %15 = tpu.matmul %13, %14, %cst {dimension_numbers = #tpu.dot_dimension_numbers<[1], [0], [0], [1], [0, 0, 1, 1], [], []>} : vector<256x36xbf16>, vector<36x128xbf16>, vector<256x128xf32> -> vector<256x128xf32>
    %c0_12 = arith.constant 0 : index
    %c0_13 = arith.constant 0 : index
    %16 = vector.load %arg3[%c0_12, %c0_13] : memref<1x128xf32, #tpu.memory_space<vmem>>, vector<1x128xf32>
    %17 = vector.broadcast %16 : vector<1x128xf32> to vector<256x128xf32>
    %18 = arith.addf %15, %17 : vector<256x128xf32>
    %cst_14 = arith.constant 2.000000e+01 : f32
    %19 = vector.broadcast %cst_14 : f32 to vector<256x128xf32>
    %20 = arith.minimumf %18, %19 : vector<256x128xf32>
    %21 = math.exp %20 : vector<256x128xf32>
    %cst_15 = arith.constant 1.000000e+00 : f32
    %22 = vector.broadcast %cst_15 : f32 to vector<256x128xf32>
    %23 = arith.addf %22, %21 : vector<256x128xf32>
    %cst_16 = arith.constant 1.000000e+00 : f32
    %24 = vector.broadcast %cst_16 : f32 to vector<256x128xf32>
    %25 = arith.addf %24, %21 : vector<256x128xf32>
    %26 = arith.mulf %23, %25 : vector<256x128xf32>
    %cst_17 = arith.constant 1.000000e+00 : f32
    %27 = vector.broadcast %cst_17 : f32 to vector<256x128xf32>
    %28 = arith.addf %26, %27 : vector<256x128xf32>
    %29 = tpu.reciprocal %28 {approx = true} : vector<256x128xf32> -> vector<256x128xf32>
    %cst_18 = arith.constant 2.000000e+00 : f32
    %30 = vector.broadcast %cst_18 : f32 to vector<256x128xf32>
    %31 = arith.mulf %30, %29 : vector<256x128xf32>
    %cst_19 = arith.constant 1.000000e+00 : f32
    %32 = vector.broadcast %cst_19 : f32 to vector<256x128xf32>
    %33 = arith.subf %32, %31 : vector<256x128xf32>
    %34 = arith.mulf %18, %33 : vector<256x128xf32>
    %35 = arith.truncf %34 : vector<256x128xf32> to vector<256x128xbf16>
    %c0_20 = arith.constant 0 : index
    %c0_21 = arith.constant 0 : index
    %36 = vector.load %arg4[%c0_20, %c0_21] : memref<256x128xbf16, #tpu.memory_space<vmem>>, vector<256x128xbf16>
    tpu.vector_store %arg4[%c0_20, %c0_21], %35 {strides = array<i32>} : memref<256x128xbf16, #tpu.memory_space<vmem>>, vector<256x128xbf16>,
    return
  }
  func.func @transform_1(%arg0: i32) -> (i32, i32) {
    %c0_i32 = arith.constant 0 : i32
    %c0_i32_0 = arith.constant 0 : i32
    %c0_i32_1 = arith.constant 0 : i32
    return %c0_i32, %c0_i32_0 : i32, i32
  }
  func.func @transform_2(%arg0: i32) -> (i32, i32) {
    %c0_i32 = arith.constant 0 : i32
    %c0_i32_0 = arith.constant 0 : i32
    %c0_i32_1 = arith.constant 0 : i32
    return %c0_i32, %c0_i32_0 : i32, i32
  }
  func.func @transform_3(%arg0: i32) -> (i32, i32) {
    %c0_i32 = arith.constant 0 : i32
    %c0_i32_0 = arith.constant 0 : i32
    return %arg0, %c0_i32 : i32, i32
  }
}

</mosaic_0001>

<llo_original>
// kernel: tpu_custom_call.1
$region0: #{tpu_custom_call.1}
  #allocation0 [shape = 'u32[]', space=smem, size = 0x4, offset = 0x4, fixed_abs, tag = 'smem constant byte address 0x4 - core index']
  #allocation1 [shape = 'u32[72,128]{1,0:T(1,128)}', space=vmem, size = 0x9000, scoped, tag = 'internal scratch']
  #allocation2 [shape = 'bf16[312,4]{1,0:T(8,128)(2,1)}', space=vmem, size = 0x13800, scoped, tag = 'scratch operand']
  #allocation3 [shape = 's32[1]{0}', space=sflag, size = 0x4, scoped, tag = 'scratch operand']
  #allocation6 [shape = 's32[]', space=sflag, size = 0x4, offset = 0, fixed_abs, tag = 'sflag constant byte address 0x0 - dummy sync flag']
  %s0 = inlined_call_operand.vmem [shape: bf16[1080,4], index: 0, kind: input, shape index: {}]
  %s1 = inlined_call_operand.vmem [shape: bf16[36,128], index: 1, kind: input, shape index: {}]
  %s2 = inlined_call_operand.vmem [shape: f32[1,128], index: 2, kind: input, shape index: {}]
  %s3 = inlined_call_operand.hbm [shape: bf16[1024,128], index: 3, kind: output, shape index: {}]
  %s4 = sld [smem:[#allocation0]]
  $region63: #{tpu_custom_call.1} parent=0
    _
  %s6 = ssub.s32 1, %s4
  %s7 = scalar_select 0, %s6, %s4
  $region1: #{tpu_custom_call.1} parent=0
    #allocation4 [shape = 'u8[131072]{0}', space=vmem, size = 0x20000, scoped, tag = 'output window, operand 0']
    #allocation5 [shape = 's32[2]{0}', space=sflag, size = 0x8, scoped, tag = 'scoped memory for tpu_custom_call.1']
    %8 = vsyncpa [#allocation5], 0
    %s9 = scalar_lea.sflag [#allocation5], 1
    %10 = vsyncpa %s9, 0
    loop: start=0, step=1, limit=6
    $region2: #{tpu_custom_call.1} parent=1 // loop_pre_header
      _
    $region3: #{tpu_custom_call.1} parent=1 // loop_header
      %s12 = sphi 0, %s16
      %p13 = scmp.ge.s32.totalorder %s12, 6
      %s20 = sphi 0, %s20
      %s22 = sphi 0, %s20
      %s23 = sphi 0, %s22
      %s37 = sphi 0, %s23
      %s41 = sphi 0, %s41
      %s43 = sphi 0, %s41
      %s44 = sphi 0, %s43
      %s58 = sphi 0, %s44
      %s64 = sphi 0, %s66
      %s67 = sphi 0, %s64
      %s68 = sphi 0, %s67
      %s84 = sphi 0, %s68
    $region4: #{tpu_custom_call.1} parent=1 // loop_header_branch
      %15 = sbr.rel (%p13) target = $region8
    $region5: #{tpu_custom_call.1} parent=1 // loop_body
      %s17 = ssub.s32 %s12, 1
      %s18 = ssub.s32 %s12, 2
      %s19 = sadd.s32 %s12, 1
      %s21 = sadd.s32 %s20, 1
      %p24 = scmp.eq.s32.totalorder %s12, 3
      %p25 = scmp.ne.s32.totalorder %s20, %s22
      %p26 = scmp.eq.s32.totalorder %s12, 0
      %p27 = por %p25, %p26
      %p28 = scmp.ne.s32.totalorder %s20, %s22
      %p29 = scmp.eq.s32.totalorder %s17, 3
      %p30 = por %p28, %p29
      %p31 = scmp.ne.s32.totalorder %s22, %s23
      %p32 = scmp.eq.s32.totalorder %s17, 0
      %p33 = por %p31, %p32
      %p34 = scmp.ne.s32.totalorder %s22, %s23
      %p35 = scmp.eq.s32.totalorder %s18, 3
      %p36 = por %p34, %p35
      %p38 = scmp.ne.s32.totalorder %s23, %s37
      %p39 = scmp.eq.s32.totalorder %s18, 0
      %p40 = por %p38, %p39
      %s42 = sadd.s32 %s41, 1
      %p45 = scmp.eq.s32.totalorder %s12, 3
      %p46 = scmp.ne.s32.totalorder %s41, %s43
      %p47 = scmp.eq.s32.totalorder %s12, 0
      %p48 = por %p46, %p47
      %p49 = scmp.ne.s32.totalorder %s41, %s43
      %p50 = scmp.eq.s32.totalorder %s17, 3
      %p51 = por %p49, %p50
      %p52 = scmp.ne.s32.totalorder %s43, %s44
      %p53 = scmp.eq.s32.totalorder %s17, 0
      %p54 = por %p52, %p53
      %p55 = scmp.ne.s32.totalorder %s43, %s44
      %p56 = scmp.eq.s32.totalorder %s18, 3
      %p57 = por %p55, %p56
      %p59 = scmp.ne.s32.totalorder %s44, %s58
      %p60 = scmp.eq.s32.totalorder %s18, 0
      %p61 = por %p59, %p60
      %s62 = ssub.s32 %s12, %s19
      %p63 = scmp.eq.s32.totalorder %s62, 0
      %s65 = sadd.s32 %s64, 1
      %s66 = scalar_select %p63, %s64, %s65
      %p69 = pneg %p63
      %p70 = scmp.eq.s32.totalorder %s12, 3
      %p71 = por %p69, %p70
      %p72 = scmp.ne.s32.totalorder %s64, %s67
      %p73 = scmp.eq.s32.totalorder %s12, 0
      %p74 = por %p72, %p73
      %p75 = scmp.ne.s32.totalorder %s64, %s67
      %p76 = scmp.eq.s32.totalorder %s17, 3
      %p77 = por %p75, %p76
      %p78 = scmp.ne.s32.totalorder %s67, %s68
      %p79 = scmp.eq.s32.totalorder %s17, 0
      %p80 = por %p78, %p79
      %p81 = scmp.ne.s32.totalorder %s67, %s68
      %p82 = scmp.eq.s32.totalorder %s18, 3
      %p83 = por %p81, %p82
      %p85 = scmp.ne.s32.totalorder %s68, %s84
      %p86 = scmp.eq.s32.totalorder %s18, 0
      %p87 = por %p85, %p86
      %p88 = scmp.le.s32.totalorder 1, %s12
      %p89 = scmp.lt.s32.totalorder %s12, 5
      %p90 = pnand %p88, %p89
      %p91 = pneg %p90
      // Predicated region
      $region9: #{tpu_custom_call.1} parent=5 // pred_check
        _
      $region10: #{tpu_custom_call.1} parent=5 // pred_check_branch
        %93 = sbr.rel (%p90) target = $region12
      $region11: #{tpu_custom_call.1} parent=5 // pred_region
        %s94 = ssub.s32 %s12, 1
        // Predicated region
        $region13: #{tpu_custom_call.1} parent=11 // pred_check
          %p95 = pneg %p33
        $region14: #{tpu_custom_call.1} parent=11 // pred_check_branch
          %97 = sbr.rel (%p95) target = $region16
        $region15: #{tpu_custom_call.1} parent=11 // pred_region
          _
        $region16: #{tpu_custom_call.1} parent=11 // pred_fallthru
          _
        // Predicated region
        $region17: #{tpu_custom_call.1} parent=11 // pred_check
          %p98 = pneg %p54
        $region18: #{tpu_custom_call.1} parent=11 // pred_check_branch
          %100 = sbr.rel (%p98) target = $region20
        $region19: #{tpu_custom_call.1} parent=11 // pred_region
          _
        $region20: #{tpu_custom_call.1} parent=11 // pred_fallthru
          _
      $region12: #{tpu_custom_call.1} parent=5 // pred_fallthru
        _
      %p101 = scmp.lt.s32.totalorder %s12, 4
      // Predicated region
      $region21: #{tpu_custom_call.1} parent=5 // pred_check
        %p102 = pneg %p101
      $region22: #{tpu_custom_call.1} parent=5 // pred_check_branch
        %104 = sbr.rel (%p102) target = $region24
      $region23: #{tpu_custom_call.1} parent=5 // pred_region
        _
      $region24: #{tpu_custom_call.1} parent=5 // pred_fallthru
        _
      %p105 = scmp.le.s32.totalorder 1, %s12
      %p106 = scmp.lt.s32.totalorder %s12, 5
      %p107 = pnand %p105, %p106
      %p108 = pneg %p107
      // Predicated region
      $region25: #{tpu_custom_call.1} parent=5 // pred_check
        _
      $region26: #{tpu_custom_call.1} parent=5 // pred_check_branch
        %110 = sbr.rel (%p107) target = $region28
      $region27: #{tpu_custom_call.1} parent=5 // pred_region
        %s111 = ssub.s32 %s12, 1
        %p112 = pneg %p33
        %p113 = pneg %p30
        %p114 = pneg %p54
        %p115 = pneg %p51
        %p116 = pneg %p80
        %p117 = pneg %p77
        %s118 = sand.u32 %s67, 1
        %s119 = scalar_lea.sflag [#allocation5], %s118
        %s120 = sand.u32 %s67, 1
        %s121 = smul.addr %s120, 128
        %s122 = scalar_lea.vmem [#allocation4], %s121
        %s123 = smul.u32 32, %s17
        %s125 = smul.u32 %s17, 256
        %s126 = sshra.s32 %s125, 3
        %s127 = sand.u32 %s125, 7
        %s128 = smul.addr %s126, 4
        %s129 = scalar_lea.vmem %s0, %s128
        // Predicated region
        $region29: #{tpu_custom_call.1} parent=27 // pred_check
          _
        $region30: #{tpu_custom_call.1} parent=27 // pred_check_branch
          %131 = sbr.rel (0) target = $region32
        $region31: #{tpu_custom_call.1} parent=27 // pred_region
          %s132 = scalar_lea.vmem %s129, 152
          %s133 = scalar_lea.vmem [#allocation2], 152
          loop: start=0, step=1, limit=1
          $region33: #{tpu_custom_call.1} parent=31 // loop_pre_header
            _
          $region34: #{tpu_custom_call.1} parent=31 // loop_header
            %s135 = sphi 0, %s139
            %p136 = scmp.ge.s32.totalorder %s135, 1
            %s140 = sphi %s129, %s129
            %s141 = sphi [#allocation2], [#allocation2]
          $region35: #{tpu_custom_call.1} parent=31 // loop_header_branch
            %138 = sbr.rel (%p136) target = $region39
          $region36: #{tpu_custom_call.1} parent=31 // loop_body
            %v142 = vld [vmem:[%s140] sm:$0xff]
            %143 = vst [vmem:[%s141] sm:$0xff] %v142
            %v144 = vld [vmem:[%s140 + $0x8] sm:$0xff]
            %145 = vst [vmem:[%s141 + $0x8] sm:$0xff] %v144
            %v146 = vld [vmem:[%s140 + $0x10] sm:$0xff]
            %147 = vst [vmem:[%s141 + $0x10] sm:$0xff] %v146
            %v148 = vld [vmem:[%s140 + $0x18] sm:$0xff]
            %149 = vst [vmem:[%s141 + $0x18] sm:$0xff] %v148
            %v150 = vld [vmem:[%s140 + $0x20] sm:$0xff]
            %151 = vst [vmem:[%s141 + $0x20] sm:$0xff] %v150
            %v152 = vld [vmem:[%s140 + $0x28] sm:$0xff]
            %153 = vst [vmem:[%s141 + $0x28] sm:$0xff] %v152
            %v154 = vld [vmem:[%s140 + $0x30] sm:$0xff]
            %155 = vst [vmem:[%s141 + $0x30] sm:$0xff] %v154
            %v156 = vld [vmem:[%s140 + $0x38] sm:$0xff]
            %157 = vst [vmem:[%s141 + $0x38] sm:$0xff] %v156
            %v158 = vld [vmem:[%s140 + $0x40] sm:$0xff]
            %159 = vst [vmem:[%s141 + $0x40] sm:$0xff] %v158
            %v160 = vld [vmem:[%s140 + $0x48] sm:$0xff]
            %161 = vst [vmem:[%s141 + $0x48] sm:$0xff] %v160
            %v162 = vld [vmem:[%s140 + $0x50] sm:$0xff]
            %163 = vst [vmem:[%s141 + $0x50] sm:$0xff] %v162
            %v164 = vld [vmem:[%s140 + $0x58] sm:$0xff]
            %165 = vst [vmem:[%s141 + $0x58] sm:$0xff] %v164
            %v166 = vld [vmem:[%s140 + $0x60] sm:$0xff]
            %167 = vst [vmem:[%s141 + $0x60] sm:$0xff] %v166
            %v168 = vld [vmem:[%s140 + $0x68] sm:$0xff]
            %169 = vst [vmem:[%s141 + $0x68] sm:$0xff] %v168
            %v170 = vld [vmem:[%s140 + $0x70] sm:$0xff]
            %171 = vst [vmem:[%s141 + $0x70] sm:$0xff] %v170
            %v172 = vld [vmem:[%s140 + $0x78] sm:$0xff]
            %173 = vst [vmem:[%s141 + $0x78] sm:$0xff] %v172
            %v174 = vld [vmem:[%s140 + $0x80] sm:$0xff]
            %175 = vst [vmem:[%s141 + $0x80] sm:$0xff] %v174
            %v176 = vld [vmem:[%s140 + $0x88] sm:$0xff]
            %177 = vst [vmem:[%s141 + $0x88] sm:$0xff] %v176
            %v178 = vld [vmem:[%s140 + $0x90] sm:$0xff]
            %179 = vst [vmem:[%s141 + $0x90] sm:$0xff] %v178
          $region37: #{tpu_custom_call.1} parent=31 // loop_footer
            %s139 = sadd.s32 1, %s135
          $region38: #{tpu_custom_call.1} parent=31 // loop_footer_branch
            %134 = sbr.rel target = $region34
          $region39: #{tpu_custom_call.1} parent=31 // loop_exit
            _
          %s181 = ssub.s32 16, 1
          loop: start=0, step=1, limit=1
          $region40: #{tpu_custom_call.1} parent=31 // loop_pre_header
            _
          $region41: #{tpu_custom_call.1} parent=31 // loop_header
            %s183 = sphi 0, %s187
            %p184 = scmp.ge.s32.totalorder %s183, 1
            %s188 = sphi %s132, %s132
            %s189 = sphi %s133, %s133
          $region42: #{tpu_custom_call.1} parent=31 // loop_header_branch
            %186 = sbr.rel (%p184) target = $region46
          $region43: #{tpu_custom_call.1} parent=31 // loop_body
            %v190 = vld [vmem:[%s188] sm:%s181]
            %191 = vst [vmem:[%s189] sm:%s181] %v190
          $region44: #{tpu_custom_call.1} parent=31 // loop_footer
            %s187 = sadd.s32 1, %s183
          $region45: #{tpu_custom_call.1} parent=31 // loop_footer_branch
            %182 = sbr.rel target = $region41
          $region46: #{tpu_custom_call.1} parent=31 // loop_exit
            _
        $region32: #{tpu_custom_call.1} parent=27 // pred_fallthru
          _
        // Predicated region
        $region47: #{tpu_custom_call.1} parent=27 // pred_check
          _
        $region48: #{tpu_custom_call.1} parent=27 // pred_check_branch
          %194 = sbr.rel (0) target = $region50
        $region49: #{tpu_custom_call.1} parent=27 // pred_region
          %195 = vsyncadd [#allocation3], 2496
        $region50: #{tpu_custom_call.1} parent=27 // pred_fallthru
          _
        %s196 = smul.u32 4, 39
        %s197 = smul.u32 %s196, 1
        %s198 = sshll.u32 %s197, 4
        %199 = dma.done [#allocation3], %s198
        %v200 = vld [vmem:[#allocation2] sm:$0xf]
        %v201 = vld [vmem:[#allocation2 + $0x4] sm:$0xf]
        %v202 = vld [vmem:[#allocation2 + $0x8] sm:$0xf]
        %v203 = vld [vmem:[#allocation2 + $0xc] sm:$0xf]
        %v204 = vld [vmem:[#allocation2 + $0x10] sm:$0xf]
        %v205 = vld [vmem:[#allocation2 + $0x14] sm:$0xf]
        %v206 = vld [vmem:[#allocation2 + $0x18] sm:$0xf]
        %v207 = vld [vmem:[#allocation2 + $0x1c] sm:$0xf]
        %v208 = vld [vmem:[#allocation2 + $0x20] sm:$0xf]
        %v209 = vld [vmem:[#allocation2 + $0x24] sm:$0xf]
        %v210 = vld [vmem:[#allocation2 + $0x28] sm:$0xf]
        %v211 = vld [vmem:[#allocation2 + $0x2c] sm:$0xf]
        %v212 = vld [vmem:[#allocation2 + $0x30] sm:$0xf]
        %v213 = vld [vmem:[#allocation2 + $0x34] sm:$0xf]
        %v214 = vld [vmem:[#allocation2 + $0x38] sm:$0xf]
        %v215 = vld [vmem:[#allocation2 + $0x3c] sm:$0xf]
        %v216 = vld [vmem:[#allocation2 + $0x40] sm:$0xf]
        %v217 = vld [vmem:[#allocation2 + $0x44] sm:$0xf]
        %v218 = vld [vmem:[#allocation2 + $0x48] sm:$0xf]
        %v219 = vld [vmem:[#allocation2 + $0x4c] sm:$0xf]
        %v220 = vld [vmem:[#allocation2 + $0x50] sm:$0xf]
        %v221 = vld [vmem:[#allocation2 + $0x54] sm:$0xf]
        %v222 = vld [vmem:[#allocation2 + $0x58] sm:$0xf]
        %v223 = vld [vmem:[#allocation2 + $0x5c] sm:$0xf]
        %v224 = vld [vmem:[#allocation2 + $0x60] sm:$0xf]
        %v225 = vld [vmem:[#allocation2 + $0x64] sm:$0xf]
        %v226 = vld [vmem:[#allocation2 + $0x68] sm:$0xf]
        %v227 = vld [vmem:[#allocation2 + $0x6c] sm:$0xf]
        %v228 = vld [vmem:[#allocation2 + $0x70] sm:$0xf]
        %v229 = vld [vmem:[#allocation2 + $0x74] sm:$0xf]
        %v230 = vld [vmem:[#allocation2 + $0x78] sm:$0xf]
        %v231 = vld [vmem:[#allocation2 + $0x7c] sm:$0xf]
        %v232 = vld [vmem:[#allocation2 + $0x80] sm:$0x1]
        %v233 = vld [vmem:[#allocation2] sm:$0xe]
        %v234 = vld [vmem:[#allocation2 + $0x80] sm:$0xf]
        %v235 = vld [vmem:[#allocation2 + $0x84] sm:$0xf]
        %v236 = vld [vmem:[#allocation2 + $0x88] sm:$0xf]
        %v237 = vld [vmem:[#allocation2 + $0x8c] sm:$0x1]
        %v238 = vld [vmem:[#allocation2 + $0xc] sm:$0xe]
        %v239 = vld [vmem:[#allocation2 + $0x8c] sm:$0xf]
        %v240 = vld [vmem:[#allocation2 + $0x90] sm:$0xf]
        %v241 = vld [vmem:[#allocation2 + $0x94] sm:$0xf]
        %v242 = vld [vmem:[#allocation2 + $0x98] sm:$0x1]
        %v243 = vld [vmem:[#allocation2 + $0x18] sm:$0xe]
        %v276 = vunpack.c.l.b16 %v200
        %v277 = vunpack.c.l.b16 %v201
        %v278 = vunpack.c.l.b16 %v202
        %v279 = vunpack.c.l.b16 %v203
        %v280 = vunpack.c.l.b16 %v204
        %v281 = vunpack.c.l.b16 %v205
        %v282 = vunpack.c.l.b16 %v206
        %v283 = vunpack.c.l.b16 %v207
        %v284 = vunpack.c.l.b16 %v208
        %v285 = vunpack.c.l.b16 %v209
        %v286 = vunpack.c.l.b16 %v210
        %v287 = vunpack.c.l.b16 %v211
        %v288 = vunpack.c.l.b16 %v212
        %v289 = vunpack.c.l.b16 %v213
        %v290 = vunpack.c.l.b16 %v214
        %v291 = vunpack.c.l.b16 %v215
        %v292 = vunpack.c.l.b16 %v216
        %v293 = vunpack.c.l.b16 %v217
        %v294 = vunpack.c.l.b16 %v218
        %v295 = vunpack.c.l.b16 %v219
        %v296 = vunpack.c.l.b16 %v220
        %v297 = vunpack.c.l.b16 %v221
        %v298 = vunpack.c.l.b16 %v222
        %v299 = vunpack.c.l.b16 %v223
        %v300 = vunpack.c.l.b16 %v224
        %v301 = vunpack.c.l.b16 %v225
        %v302 = vunpack.c.l.b16 %v226
        %v303 = vunpack.c.l.b16 %v227
        %v304 = vunpack.c.l.b16 %v228
        %v305 = vunpack.c.l.b16 %v229
        %v306 = vunpack.c.l.b16 %v230
        %v307 = vunpack.c.l.b16 %v231
        %v308 = vpack.c.b16 %v277, %v276
        %v309 = vpack.c.b16 %v279, %v278
        %v310 = vpack.c.b16 %v281, %v280
        %v311 = vpack.c.b16 %v283, %v282
        %v312 = vpack.c.b16 %v285, %v284
        %v313 = vpack.c.b16 %v287, %v286
        %v314 = vpack.c.b16 %v289, %v288
        %v315 = vpack.c.b16 %v291, %v290
        %v316 = vpack.c.b16 %v293, %v292
        %v317 = vpack.c.b16 %v295, %v294
        %v318 = vpack.c.b16 %v297, %v296
        %v319 = vpack.c.b16 %v299, %v298
        %v320 = vpack.c.b16 %v301, %v300
        %v321 = vpack.c.b16 %v303, %v302
        %v322 = vpack.c.b16 %v305, %v304
        %v323 = vpack.c.b16 %v307, %v306
        %v325 = vunpack.c.l.b16 %v232
        %v326 = vpack.c.b16 %v325, %v325
        %vm327 = vsmask.f32 7424
        %v329 = vshrl.u32 %v308, 16
        %v331 = vshll.u32 %v308, 16
        %v333 = vrot.slane %v331, 1
        %v334 = vor.u32 %v329, %v333
        %v336 = vshll.u32 %v309, 16
        %v338 = vrot.slane %v336, 1
        %v339 = vsel %vm327, %v334, %v338
        %v340 = vshrl.u32 %v309, 16
        %v342 = vor.u32 %v340, %v338
        %v344 = vshll.u32 %v310, 16
        %v346 = vrot.slane %v344, 1
        %v347 = vsel %vm327, %v342, %v346
        %v348 = vshrl.u32 %v310, 16
        %v350 = vor.u32 %v348, %v346
        %v352 = vshll.u32 %v311, 16
        %v354 = vrot.slane %v352, 1
        %v355 = vsel %vm327, %v350, %v354
        %v356 = vshrl.u32 %v311, 16
        %v358 = vor.u32 %v356, %v354
        %v360 = vshll.u32 %v312, 16
        %v362 = vrot.slane %v360, 1
        %v363 = vsel %vm327, %v358, %v362
        %v364 = vshrl.u32 %v312, 16
        %v366 = vor.u32 %v364, %v362
        %v368 = vshll.u32 %v313, 16
        %v370 = vrot.slane %v368, 1
        %v371 = vsel %vm327, %v366, %v370
        %v372 = vshrl.u32 %v313, 16
        %v374 = vor.u32 %v372, %v370
        %v376 = vshll.u32 %v314, 16
        %v378 = vrot.slane %v376, 1
        %v379 = vsel %vm327, %v374, %v378
        %v380 = vshrl.u32 %v314, 16
        %v382 = vor.u32 %v380, %v378
        %v384 = vshll.u32 %v315, 16
        %v386 = vrot.slane %v384, 1
        %v387 = vsel %vm327, %v382, %v386
        %v388 = vshrl.u32 %v315, 16
        %v390 = vor.u32 %v388, %v386
        %v392 = vshll.u32 %v316, 16
        %v394 = vrot.slane %v392, 1
        %v395 = vsel %vm327, %v390, %v394
        %v396 = vshrl.u32 %v316, 16
        %v398 = vor.u32 %v396, %v394
        %v400 = vshll.u32 %v317, 16
        %v402 = vrot.slane %v400, 1
        %v403 = vsel %vm327, %v398, %v402
        %v404 = vshrl.u32 %v317, 16
        %v406 = vor.u32 %v404, %v402
        %v408 = vshll.u32 %v318, 16
        %v410 = vrot.slane %v408, 1
        %v411 = vsel %vm327, %v406, %v410
        %v412 = vshrl.u32 %v318, 16
        %v414 = vor.u32 %v412, %v410
        %v416 = vshll.u32 %v319, 16
        %v418 = vrot.slane %v416, 1
        %v419 = vsel %vm327, %v414, %v418
        %v420 = vshrl.u32 %v319, 16
        %v422 = vor.u32 %v420, %v418
        %v424 = vshll.u32 %v320, 16
        %v426 = vrot.slane %v424, 1
        %v427 = vsel %vm327, %v422, %v426
        %v428 = vshrl.u32 %v320, 16
        %v430 = vor.u32 %v428, %v426
        %v432 = vshll.u32 %v321, 16
        %v434 = vrot.slane %v432, 1
        %v435 = vsel %vm327, %v430, %v434
        %v436 = vshrl.u32 %v321, 16
        %v438 = vor.u32 %v436, %v434
        %v440 = vshll.u32 %v322, 16
        %v442 = vrot.slane %v440, 1
        %v443 = vsel %vm327, %v438, %v442
        %v444 = vshrl.u32 %v322, 16
        %v446 = vor.u32 %v444, %v442
        %v448 = vshll.u32 %v323, 16
        %v450 = vrot.slane %v448, 1
        %v451 = vsel %vm327, %v446, %v450
        %v452 = vshrl.u32 %v323, 16
        %v454 = vor.u32 %v452, %v450
        %v456 = vshll.u32 %v326, 16
        %v458 = vrot.slane %v456, 1
        %v459 = vsel %vm327, %v454, %v458
        %460 = vrot.lane.b32.xlu0 %v339, 4
        %v461 = vpop.permute.xlu0 %460
        %462 = vrot.lane.b32.xlu0 %v347, 4
        %v463 = vpop.permute.xlu0 %462
        %464 = vrot.lane.b32.xlu0 %v355, 4
        %v465 = vpop.permute.xlu0 %464
        %466 = vrot.lane.b32.xlu0 %v363, 4
        %v467 = vpop.permute.xlu0 %466
        %468 = vrot.lane.b32.xlu0 %v371, 4
        %v469 = vpop.permute.xlu0 %468
        %470 = vrot.lane.b32.xlu0 %v379, 4
        %v471 = vpop.permute.xlu0 %470
        %472 = vrot.lane.b32.xlu0 %v387, 4
        %v473 = vpop.permute.xlu0 %472
        %474 = vrot.lane.b32.xlu0 %v395, 4
        %v475 = vpop.permute.xlu0 %474
        %476 = vrot.lane.b32.xlu0 %v403, 4
        %v477 = vpop.permute.xlu0 %476
        %478 = vrot.lane.b32.xlu0 %v411, 4
        %v479 = vpop.permute.xlu0 %478
        %480 = vrot.lane.b32.xlu0 %v419, 4
        %v481 = vpop.permute.xlu0 %480
        %482 = vrot.lane.b32.xlu0 %v427, 4
        %v483 = vpop.permute.xlu0 %482
        %484 = vrot.lane.b32.xlu0 %v435, 4
        %v485 = vpop.permute.xlu0 %484
        %486 = vrot.lane.b32.xlu0 %v443, 4
        %v487 = vpop.permute.xlu0 %486
        %488 = vrot.lane.b32.xlu0 %v451, 4
        %v489 = vpop.permute.xlu0 %488
        %490 = vrot.lane.b32.xlu0 %v459, 4
        %v491 = vpop.permute.xlu0 %490
        %v493 = vunpack.c.l.b16 %v233
        %v494 = vpack.c.b16 %v277, %v493
        %vm495 = vcmask 1046528
        %v496 = vrot.slane %v494, 1
        %v497 = vrot.slane %v309, 1
        %v498 = vsel %vm495, %v496, %v497
        %v499 = vrot.slane %v310, 1
        %v500 = vsel %vm495, %v497, %v499
        %v501 = vrot.slane %v311, 1
        %v502 = vsel %vm495, %v499, %v501
        %v503 = vrot.slane %v312, 1
        %v504 = vsel %vm495, %v501, %v503
        %v505 = vrot.slane %v313, 1
        %v506 = vsel %vm495, %v503, %v505
        %v507 = vrot.slane %v314, 1
        %v508 = vsel %vm495, %v505, %v507
        %v509 = vrot.slane %v315, 1
        %v510 = vsel %vm495, %v507, %v509
        %v511 = vrot.slane %v316, 1
        %v512 = vsel %vm495, %v509, %v511
        %v513 = vrot.slane %v317, 1
        %v514 = vsel %vm495, %v511, %v513
        %v515 = vrot.slane %v318, 1
        %v516 = vsel %vm495, %v513, %v515
        %v517 = vrot.slane %v319, 1
        %v518 = vsel %vm495, %v515, %v517
        %v519 = vrot.slane %v320, 1
        %v520 = vsel %vm495, %v517, %v519
        %v521 = vrot.slane %v321, 1
        %v522 = vsel %vm495, %v519, %v521
        %v523 = vrot.slane %v322, 1
        %v524 = vsel %vm495, %v521, %v523
        %v525 = vrot.slane %v323, 1
        %v526 = vsel %vm495, %v523, %v525
        %v527 = vrot.slane %v326, 1
        %v528 = vsel %vm495, %v525, %v527
        %529 = vrot.lane.b32.xlu0 %v498, 8
        %v530 = vpop.permute.xlu0 %529
        %531 = vrot.lane.b32.xlu0 %v500, 8
        %v532 = vpop.permute.xlu0 %531
        %533 = vrot.lane.b32.xlu0 %v502, 8
        %v534 = vpop.permute.xlu0 %533
        %535 = vrot.lane.b32.xlu0 %v504, 8
        %v536 = vpop.permute.xlu0 %535
        %537 = vrot.lane.b32.xlu0 %v506, 8
        %v538 = vpop.permute.xlu0 %537
        %539 = vrot.lane.b32.xlu0 %v508, 8
        %v540 = vpop.permute.xlu0 %539
        %541 = vrot.lane.b32.xlu0 %v510, 8
        %v542 = vpop.permute.xlu0 %541
        %543 = vrot.lane.b32.xlu0 %v512, 8
        %v544 = vpop.permute.xlu0 %543
        %545 = vrot.lane.b32.xlu0 %v514, 8
        %v546 = vpop.permute.xlu0 %545
        %547 = vrot.lane.b32.xlu0 %v516, 8
        %v548 = vpop.permute.xlu0 %547
        %549 = vrot.lane.b32.xlu0 %v518, 8
        %v550 = vpop.permute.xlu0 %549
        %551 = vrot.lane.b32.xlu0 %v520, 8
        %v552 = vpop.permute.xlu0 %551
        %553 = vrot.lane.b32.xlu0 %v522, 8
        %v554 = vpop.permute.xlu0 %553
        %555 = vrot.lane.b32.xlu0 %v524, 8
        %v556 = vpop.permute.xlu0 %555
        %557 = vrot.lane.b32.xlu0 %v526, 8
        %v558 = vpop.permute.xlu0 %557
        %559 = vrot.lane.b32.xlu0 %v528, 8
        %v560 = vpop.permute.xlu0 %559
        %v564 = vunpack.c.l.b16 %v234
        %v565 = vunpack.c.l.b16 %v235
        %v566 = vunpack.c.l.b16 %v236
        %v567 = vpack.c.b16 %v280, %v279
        %v568 = vpack.c.b16 %v282, %v281
        %v569 = vpack.c.b16 %v284, %v283
        %v570 = vpack.c.b16 %v286, %v285
        %v571 = vpack.c.b16 %v288, %v287
        %v572 = vpack.c.b16 %v290, %v289
        %v573 = vpack.c.b16 %v292, %v291
        %v574 = vpack.c.b16 %v294, %v293
        %v575 = vpack.c.b16 %v296, %v295
        %v576 = vpack.c.b16 %v298, %v297
        %v577 = vpack.c.b16 %v300, %v299
        %v578 = vpack.c.b16 %v302, %v301
        %v579 = vpack.c.b16 %v304, %v303
        %v580 = vpack.c.b16 %v306, %v305
        %v581 = vpack.c.b16 %v564, %v307
        %v582 = vpack.c.b16 %v566, %v565
        %583 = vrot.lane.b32.xlu0 %v567, 12
        %v584 = vpop.permute.xlu0 %583
        %585 = vrot.lane.b32.xlu0 %v568, 12
        %v586 = vpop.permute.xlu0 %585
        %587 = vrot.lane.b32.xlu0 %v569, 12
        %v588 = vpop.permute.xlu0 %587
        %589 = vrot.lane.b32.xlu0 %v570, 12
        %v590 = vpop.permute.xlu0 %589
        %591 = vrot.lane.b32.xlu0 %v571, 12
        %v592 = vpop.permute.xlu0 %591
        %593 = vrot.lane.b32.xlu0 %v572, 12
        %v594 = vpop.permute.xlu0 %593
        %595 = vrot.lane.b32.xlu0 %v573, 12
        %v596 = vpop.permute.xlu0 %595
        %597 = vrot.lane.b32.xlu0 %v574, 12
        %v598 = vpop.permute.xlu0 %597
        %599 = vrot.lane.b32.xlu0 %v575, 12
        %v600 = vpop.permute.xlu0 %599
        %601 = vrot.lane.b32.xlu0 %v576, 12
        %v602 = vpop.permute.xlu0 %601
        %603 = vrot.lane.b32.xlu0 %v577, 12
        %v604 = vpop.permute.xlu0 %603
        %605 = vrot.lane.b32.xlu0 %v578, 12
        %v606 = vpop.permute.xlu0 %605
        %607 = vrot.lane.b32.xlu0 %v579, 12
        %v608 = vpop.permute.xlu0 %607
        %609 = vrot.lane.b32.xlu0 %v580, 12
        %v610 = vpop.permute.xlu0 %609
        %611 = vrot.lane.b32.xlu0 %v581, 12
        %v612 = vpop.permute.xlu0 %611
        %613 = vrot.lane.b32.xlu0 %v582, 12
        %v614 = vpop.permute.xlu0 %613
        %v616 = vunpack.c.l.b16 %v237
        %v617 = vpack.c.b16 %v616, %v616
        %v619 = vshrl.u32 %v567, 16
        %v621 = vshll.u32 %v567, 16
        %v623 = vrot.slane %v621, 1
        %v624 = vor.u32 %v619, %v623
        %v626 = vshll.u32 %v568, 16
        %v628 = vrot.slane %v626, 1
        %v629 = vsel %vm327, %v624, %v628
        %v630 = vshrl.u32 %v568, 16
        %v632 = vor.u32 %v630, %v628
        %v634 = vshll.u32 %v569, 16
        %v636 = vrot.slane %v634, 1
        %v637 = vsel %vm327, %v632, %v636
        %v638 = vshrl.u32 %v569, 16
        %v640 = vor.u32 %v638, %v636
        %v642 = vshll.u32 %v570, 16
        %v644 = vrot.slane %v642, 1
        %v645 = vsel %vm327, %v640, %v644
        %v646 = vshrl.u32 %v570, 16
        %v648 = vor.u32 %v646, %v644
        %v650 = vshll.u32 %v571, 16
        %v652 = vrot.slane %v650, 1
        %v653 = vsel %vm327, %v648, %v652
        %v654 = vshrl.u32 %v571, 16
        %v656 = vor.u32 %v654, %v652
        %v658 = vshll.u32 %v572, 16
        %v660 = vrot.slane %v658, 1
        %v661 = vsel %vm327, %v656, %v660
        %v662 = vshrl.u32 %v572, 16
        %v664 = vor.u32 %v662, %v660
        %v666 = vshll.u32 %v573, 16
        %v668 = vrot.slane %v666, 1
        %v669 = vsel %vm327, %v664, %v668
        %v670 = vshrl.u32 %v573, 16
        %v672 = vor.u32 %v670, %v668
        %v674 = vshll.u32 %v574, 16
        %v676 = vrot.slane %v674, 1
        %v677 = vsel %vm327, %v672, %v676
        %v678 = vshrl.u32 %v574, 16
        %v680 = vor.u32 %v678, %v676
        %v682 = vshll.u32 %v575, 16
        %v684 = vrot.slane %v682, 1
        %v685 = vsel %vm327, %v680, %v684
        %v686 = vshrl.u32 %v575, 16
        %v688 = vor.u32 %v686, %v684
        %v690 = vshll.u32 %v576, 16
        %v692 = vrot.slane %v690, 1
        %v693 = vsel %vm327, %v688, %v692
        %v694 = vshrl.u32 %v576, 16
        %v696 = vor.u32 %v694, %v692
        %v698 = vshll.u32 %v577, 16
        %v700 = vrot.slane %v698, 1
        %v701 = vsel %vm327, %v696, %v700
        %v702 = vshrl.u32 %v577, 16
        %v704 = vor.u32 %v702, %v700
        %v706 = vshll.u32 %v578, 16
        %v708 = vrot.slane %v706, 1
        %v709 = vsel %vm327, %v704, %v708
        %v710 = vshrl.u32 %v578, 16
        %v712 = vor.u32 %v710, %v708
        %v714 = vshll.u32 %v579, 16
        %v716 = vrot.slane %v714, 1
        %v717 = vsel %vm327, %v712, %v716
        %v718 = vshrl.u32 %v579, 16
        %v720 = vor.u32 %v718, %v716
        %v722 = vshll.u32 %v580, 16
        %v724 = vrot.slane %v722, 1
        %v725 = vsel %vm327, %v720, %v724
        %v726 = vshrl.u32 %v580, 16
        %v728 = vor.u32 %v726, %v724
        %v730 = vshll.u32 %v581, 16
        %v732 = vrot.slane %v730, 1
        %v733 = vsel %vm327, %v728, %v732
        %v734 = vshrl.u32 %v581, 16
        %v736 = vor.u32 %v734, %v732
        %v738 = vshll.u32 %v582, 16
        %v740 = vrot.slane %v738, 1
        %v741 = vsel %vm327, %v736, %v740
        %v742 = vshrl.u32 %v582, 16
        %v744 = vor.u32 %v742, %v740
        %v746 = vshll.u32 %v617, 16
        %v748 = vrot.slane %v746, 1
        %v749 = vsel %vm327, %v744, %v748
        %750 = vrot.lane.b32.xlu0 %v629, 16
        %v751 = vpop.permute.xlu0 %750
        %752 = vrot.lane.b32.xlu0 %v637, 16
        %v753 = vpop.permute.xlu0 %752
        %754 = vrot.lane.b32.xlu0 %v645, 16
        %v755 = vpop.permute.xlu0 %754
        %756 = vrot.lane.b32.xlu0 %v653, 16
        %v757 = vpop.permute.xlu0 %756
        %758 = vrot.lane.b32.xlu0 %v661, 16
        %v759 = vpop.permute.xlu0 %758
        %760 = vrot.lane.b32.xlu0 %v669, 16
        %v761 = vpop.permute.xlu0 %760
        %762 = vrot.lane.b32.xlu0 %v677, 16
        %v763 = vpop.permute.xlu0 %762
        %764 = vrot.lane.b32.xlu0 %v685, 16
        %v765 = vpop.permute.xlu0 %764
        %766 = vrot.lane.b32.xlu0 %v693, 16
        %v767 = vpop.permute.xlu0 %766
        %768 = vrot.lane.b32.xlu0 %v701, 16
        %v769 = vpop.permute.xlu0 %768
        %770 = vrot.lane.b32.xlu0 %v709, 16
        %v771 = vpop.permute.xlu0 %770
        %772 = vrot.lane.b32.xlu0 %v717, 16
        %v773 = vpop.permute.xlu0 %772
        %774 = vrot.lane.b32.xlu0 %v725, 16
        %v775 = vpop.permute.xlu0 %774
        %776 = vrot.lane.b32.xlu0 %v733, 16
        %v777 = vpop.permute.xlu0 %776
        %778 = vrot.lane.b32.xlu0 %v741, 16
        %v779 = vpop.permute.xlu0 %778
        %780 = vrot.lane.b32.xlu0 %v749, 16
        %v781 = vpop.permute.xlu0 %780
        %v783 = vunpack.c.l.b16 %v238
        %v784 = vpack.c.b16 %v280, %v783
        %v785 = vrot.slane %v784, 1
        %v786 = vrot.slane %v568, 1
        %v787 = vsel %vm495, %v785, %v786
        %v788 = vrot.slane %v569, 1
        %v789 = vsel %vm495, %v786, %v788
        %v790 = vrot.slane %v570, 1
        %v791 = vsel %vm495, %v788, %v790
        %v792 = vrot.slane %v571, 1
        %v793 = vsel %vm495, %v790, %v792
        %v794 = vrot.slane %v572, 1
        %v795 = vsel %vm495, %v792, %v794
        %v796 = vrot.slane %v573, 1
        %v797 = vsel %vm495, %v794, %v796
        %v798 = vrot.slane %v574, 1
        %v799 = vsel %vm495, %v796, %v798
        %v800 = vrot.slane %v575, 1
        %v801 = vsel %vm495, %v798, %v800
        %v802 = vrot.slane %v576, 1
        %v803 = vsel %vm495, %v800, %v802
        %v804 = vrot.slane %v577, 1
        %v805 = vsel %vm495, %v802, %v804
        %v806 = vrot.slane %v578, 1
        %v807 = vsel %vm495, %v804, %v806
        %v808 = vrot.slane %v579, 1
        %v809 = vsel %vm495, %v806, %v808
        %v810 = vrot.slane %v580, 1
        %v811 = vsel %vm495, %v808, %v810
        %v812 = vrot.slane %v581, 1
        %v813 = vsel %vm495, %v810, %v812
        %v814 = vrot.slane %v582, 1
        %v815 = vsel %vm495, %v812, %v814
        %v816 = vrot.slane %v617, 1
        %v817 = vsel %vm495, %v814, %v816
        %818 = vrot.lane.b32.xlu0 %v787, 20
        %v819 = vpop.permute.xlu0 %818
        %820 = vrot.lane.b32.xlu0 %v789, 20
        %v821 = vpop.permute.xlu0 %820
        %822 = vrot.lane.b32.xlu0 %v791, 20
        %v823 = vpop.permute.xlu0 %822
        %824 = vrot.lane.b32.xlu0 %v793, 20
        %v825 = vpop.permute.xlu0 %824
        %826 = vrot.lane.b32.xlu0 %v795, 20
        %v827 = vpop.permute.xlu0 %826
        %828 = vrot.lane.b32.xlu0 %v797, 20
        %v829 = vpop.permute.xlu0 %828
        %830 = vrot.lane.b32.xlu0 %v799, 20
        %v831 = vpop.permute.xlu0 %830
        %832 = vrot.lane.b32.xlu0 %v801, 20
        %v833 = vpop.permute.xlu0 %832
        %834 = vrot.lane.b32.xlu0 %v803, 20
        %v835 = vpop.permute.xlu0 %834
        %836 = vrot.lane.b32.xlu0 %v805, 20
        %v837 = vpop.permute.xlu0 %836
        %838 = vrot.lane.b32.xlu0 %v807, 20
        %v839 = vpop.permute.xlu0 %838
        %840 = vrot.lane.b32.xlu0 %v809, 20
        %v841 = vpop.permute.xlu0 %840
        %842 = vrot.lane.b32.xlu0 %v811, 20
        %v843 = vpop.permute.xlu0 %842
        %844 = vrot.lane.b32.xlu0 %v813, 20
        %v845 = vpop.permute.xlu0 %844
        %846 = vrot.lane.b32.xlu0 %v815, 20
        %v847 = vpop.permute.xlu0 %846
        %848 = vrot.lane.b32.xlu0 %v817, 20
        %v849 = vpop.permute.xlu0 %848
        %v853 = vunpack.c.l.b16 %v239
        %v854 = vunpack.c.l.b16 %v240
        %v855 = vunpack.c.l.b16 %v241
        %v856 = vpack.c.b16 %v565, %v564
        %v857 = vpack.c.b16 %v853, %v566
        %v858 = vpack.c.b16 %v855, %v854
        %859 = vrot.lane.b32.xlu0 %v311, 24
        %v860 = vpop.permute.xlu0 %859
        %861 = vrot.lane.b32.xlu0 %v312, 24
        %v862 = vpop.permute.xlu0 %861
        %863 = vrot.lane.b32.xlu0 %v313, 24
        %v864 = vpop.permute.xlu0 %863
        %865 = vrot.lane.b32.xlu0 %v314, 24
        %v866 = vpop.permute.xlu0 %865
        %867 = vrot.lane.b32.xlu0 %v315, 24
        %v868 = vpop.permute.xlu0 %867
        %869 = vrot.lane.b32.xlu0 %v316, 24
        %v870 = vpop.permute.xlu0 %869
        %871 = vrot.lane.b32.xlu0 %v317, 24
        %v872 = vpop.permute.xlu0 %871
        %873 = vrot.lane.b32.xlu0 %v318, 24
        %v874 = vpop.permute.xlu0 %873
        %875 = vrot.lane.b32.xlu0 %v319, 24
        %v876 = vpop.permute.xlu0 %875
        %877 = vrot.lane.b32.xlu0 %v320, 24
        %v878 = vpop.permute.xlu0 %877
        %879 = vrot.lane.b32.xlu0 %v321, 24
        %v880 = vpop.permute.xlu0 %879
        %881 = vrot.lane.b32.xlu0 %v322, 24
        %v882 = vpop.permute.xlu0 %881
        %883 = vrot.lane.b32.xlu0 %v323, 24
        %v884 = vpop.permute.xlu0 %883
        %885 = vrot.lane.b32.xlu0 %v856, 24
        %v886 = vpop.permute.xlu0 %885
        %887 = vrot.lane.b32.xlu0 %v857, 24
        %v888 = vpop.permute.xlu0 %887
        %889 = vrot.lane.b32.xlu0 %v858, 24
        %v890 = vpop.permute.xlu0 %889
        %v892 = vunpack.c.l.b16 %v242
        %v893 = vpack.c.b16 %v892, %v892
        %v895 = vshll.u32 %v856, 16
        %v897 = vrot.slane %v895, 1
        %v898 = vsel %vm327, %v454, %v897
        %v899 = vshrl.u32 %v856, 16
        %v901 = vor.u32 %v899, %v897
        %v903 = vshll.u32 %v857, 16
        %v905 = vrot.slane %v903, 1
        %v906 = vsel %vm327, %v901, %v905
        %v907 = vshrl.u32 %v857, 16
        %v909 = vor.u32 %v907, %v905
        %v911 = vshll.u32 %v858, 16
        %v913 = vrot.slane %v911, 1
        %v914 = vsel %vm327, %v909, %v913
        %v915 = vshrl.u32 %v858, 16
        %v917 = vor.u32 %v915, %v913
        %v919 = vshll.u32 %v893, 16
        %v921 = vrot.slane %v919, 1
        %v922 = vsel %vm327, %v917, %v921
        %923 = vrot.lane.b32.xlu0 %v363, 28
        %v924 = vpop.permute.xlu0 %923
        %925 = vrot.lane.b32.xlu0 %v371, 28
        %v926 = vpop.permute.xlu0 %925
        %927 = vrot.lane.b32.xlu0 %v379, 28
        %v928 = vpop.permute.xlu0 %927
        %929 = vrot.lane.b32.xlu0 %v387, 28
        %v930 = vpop.permute.xlu0 %929
        %931 = vrot.lane.b32.xlu0 %v395, 28
        %v932 = vpop.permute.xlu0 %931
        %933 = vrot.lane.b32.xlu0 %v403, 28
        %v934 = vpop.permute.xlu0 %933
        %935 = vrot.lane.b32.xlu0 %v411, 28
        %v936 = vpop.permute.xlu0 %935
        %937 = vrot.lane.b32.xlu0 %v419, 28
        %v938 = vpop.permute.xlu0 %937
        %939 = vrot.lane.b32.xlu0 %v427, 28
        %v940 = vpop.permute.xlu0 %939
        %941 = vrot.lane.b32.xlu0 %v435, 28
        %v942 = vpop.permute.xlu0 %941
        %943 = vrot.lane.b32.xlu0 %v443, 28
        %v944 = vpop.permute.xlu0 %943
        %945 = vrot.lane.b32.xlu0 %v451, 28
        %v946 = vpop.permute.xlu0 %945
        %947 = vrot.lane.b32.xlu0 %v898, 28
        %v948 = vpop.permute.xlu0 %947
        %949 = vrot.lane.b32.xlu0 %v906, 28
        %v950 = vpop.permute.xlu0 %949
        %951 = vrot.lane.b32.xlu0 %v914, 28
        %v952 = vpop.permute.xlu0 %951
        %953 = vrot.lane.b32.xlu0 %v922, 28
        %v954 = vpop.permute.xlu0 %953
        %v956 = vunpack.c.l.b16 %v243
        %v957 = vpack.c.b16 %v283, %v956
        %v958 = vrot.slane %v957, 1
        %v959 = vsel %vm495, %v958, %v503
        %v960 = vrot.slane %v856, 1
        %v961 = vsel %vm495, %v525, %v960
        %v962 = vrot.slane %v857, 1
        %v963 = vsel %vm495, %v960, %v962
        %v964 = vrot.slane %v858, 1
        %v965 = vsel %vm495, %v962, %v964
        %v966 = vrot.slane %v893, 1
        %v967 = vsel %vm495, %v964, %v966
        %968 = vrot.lane.b32.xlu0 %v959, 32
        %v969 = vpop.permute.xlu0 %968
        %970 = vrot.lane.b32.xlu0 %v506, 32
        %v971 = vpop.permute.xlu0 %970
        %972 = vrot.lane.b32.xlu0 %v508, 32
        %v973 = vpop.permute.xlu0 %972
        %974 = vrot.lane.b32.xlu0 %v510, 32
        %v975 = vpop.permute.xlu0 %974
        %976 = vrot.lane.b32.xlu0 %v512, 32
        %v977 = vpop.permute.xlu0 %976
        %978 = vrot.lane.b32.xlu0 %v514, 32
        %v979 = vpop.permute.xlu0 %978
        %980 = vrot.lane.b32.xlu0 %v516, 32
        %v981 = vpop.permute.xlu0 %980
        %982 = vrot.lane.b32.xlu0 %v518, 32
        %v983 = vpop.permute.xlu0 %982
        %984 = vrot.lane.b32.xlu0 %v520, 32
        %v985 = vpop.permute.xlu0 %984
        %986 = vrot.lane.b32.xlu0 %v522, 32
        %v987 = vpop.permute.xlu0 %986
        %988 = vrot.lane.b32.xlu0 %v524, 32
        %v989 = vpop.permute.xlu0 %988
        %990 = vrot.lane.b32.xlu0 %v526, 32
        %v991 = vpop.permute.xlu0 %990
        %992 = vrot.lane.b32.xlu0 %v961, 32
        %v993 = vpop.permute.xlu0 %992
        %994 = vrot.lane.b32.xlu0 %v963, 32
        %v995 = vpop.permute.xlu0 %994
        %996 = vrot.lane.b32.xlu0 %v965, 32
        %v997 = vpop.permute.xlu0 %996
        %998 = vrot.lane.b32.xlu0 %v967, 32
        %v999 = vpop.permute.xlu0 %998
        %vm1000 = vcmask 31744
        %v1002 = vsel %vm1000, %v308, %v461
        %v1004 = vsel %vm1000, %v309, %v463
        %v1006 = vsel %vm1000, %v310, %v465
        %v1008 = vsel %vm1000, %v311, %v467
        %v1010 = vsel %vm1000, %v312, %v469
        %v1012 = vsel %vm1000, %v313, %v471
        %v1014 = vsel %vm1000, %v314, %v473
        %v1016 = vsel %vm1000, %v315, %v475
        %v1018 = vsel %vm1000, %v316, %v477
        %v1020 = vsel %vm1000, %v317, %v479
        %v1022 = vsel %vm1000, %v318, %v481
        %v1024 = vsel %vm1000, %v319, %v483
        %v1026 = vsel %vm1000, %v320, %v485
        %v1028 = vsel %vm1000, %v321, %v487
        %v1030 = vsel %vm1000, %v322, %v489
        %v1032 = vsel %vm1000, %v323, %v491
        %vm1033 = vcmask 64512
        %v1035 = vsel %vm1033, %v1002, %v530
        %v1037 = vsel %vm1033, %v1004, %v532
        %v1039 = vsel %vm1033, %v1006, %v534
        %v1041 = vsel %vm1033, %v1008, %v536
        %v1043 = vsel %vm1033, %v1010, %v538
        %v1045 = vsel %vm1033, %v1012, %v540
        %v1047 = vsel %vm1033, %v1014, %v542
        %v1049 = vsel %vm1033, %v1016, %v544
        %v1051 = vsel %vm1033, %v1018, %v546
        %v1053 = vsel %vm1033, %v1020, %v548
        %v1055 = vsel %vm1033, %v1022, %v550
        %v1057 = vsel %vm1033, %v1024, %v552
        %v1059 = vsel %vm1033, %v1026, %v554
        %v1061 = vsel %vm1033, %v1028, %v556
        %v1063 = vsel %vm1033, %v1030, %v558
        %v1065 = vsel %vm1033, %v1032, %v560
        %vm1066 = vcmask 97280
        %v1068 = vsel %vm1066, %v1035, %v584
        %v1070 = vsel %vm1066, %v1037, %v586
        %v1072 = vsel %vm1066, %v1039, %v588
        %v1074 = vsel %vm1066, %v1041, %v590
        %v1076 = vsel %vm1066, %v1043, %v592
        %v1078 = vsel %vm1066, %v1045, %v594
        %v1080 = vsel %vm1066, %v1047, %v596
        %v1082 = vsel %vm1066, %v1049, %v598
        %v1084 = vsel %vm1066, %v1051, %v600
        %v1086 = vsel %vm1066, %v1053, %v602
        %v1088 = vsel %vm1066, %v1055, %v604
        %v1090 = vsel %vm1066, %v1057, %v606
        %v1092 = vsel %vm1066, %v1059, %v608
        %v1094 = vsel %vm1066, %v1061, %v610
        %v1096 = vsel %vm1066, %v1063, %v612
        %v1098 = vsel %vm1066, %v1065, %v614
        %vm1099 = vcmask 130048
        %v1101 = vsel %vm1099, %v1068, %v751
        %v1103 = vsel %vm1099, %v1070, %v753
        %v1105 = vsel %vm1099, %v1072, %v755
        %v1107 = vsel %vm1099, %v1074, %v757
        %v1109 = vsel %vm1099, %v1076, %v759
        %v1111 = vsel %vm1099, %v1078, %v761
        %v1113 = vsel %vm1099, %v1080, %v763
        %v1115 = vsel %vm1099, %v1082, %v765
        %v1117 = vsel %vm1099, %v1084, %v767
        %v1119 = vsel %vm1099, %v1086, %v769
        %v1121 = vsel %vm1099, %v1088, %v771
        %v1123 = vsel %vm1099, %v1090, %v773
        %v1125 = vsel %vm1099, %v1092, %v775
        %v1127 = vsel %vm1099, %v1094, %v777
        %v1129 = vsel %vm1099, %v1096, %v779
        %v1131 = vsel %vm1099, %v1098, %v781
        %vm1132 = vcmask 162816
        %v1134 = vsel %vm1132, %v1101, %v819
        %v1136 = vsel %vm1132, %v1103, %v821
        %v1138 = vsel %vm1132, %v1105, %v823
        %v1140 = vsel %vm1132, %v1107, %v825
        %v1142 = vsel %vm1132, %v1109, %v827
        %v1144 = vsel %vm1132, %v1111, %v829
        %v1146 = vsel %vm1132, %v1113, %v831
        %v1148 = vsel %vm1132, %v1115, %v833
        %v1150 = vsel %vm1132, %v1117, %v835
        %v1152 = vsel %vm1132, %v1119, %v837
        %v1154 = vsel %vm1132, %v1121, %v839
        %v1156 = vsel %vm1132, %v1123, %v841
        %v1158 = vsel %vm1132, %v1125, %v843
        %v1160 = vsel %vm1132, %v1127, %v845
        %v1162 = vsel %vm1132, %v1129, %v847
        %v1164 = vsel %vm1132, %v1131, %v849
        %vm1165 = vcmask 195584
        %v1167 = vsel %vm1165, %v1134, %v860
        %v1169 = vsel %vm1165, %v1136, %v862
        %v1171 = vsel %vm1165, %v1138, %v864
        %v1173 = vsel %vm1165, %v1140, %v866
        %v1175 = vsel %vm1165, %v1142, %v868
        %v1177 = vsel %vm1165, %v1144, %v870
        %v1179 = vsel %vm1165, %v1146, %v872
        %v1181 = vsel %vm1165, %v1148, %v874
        %v1183 = vsel %vm1165, %v1150, %v876
        %v1185 = vsel %vm1165, %v1152, %v878
        %v1187 = vsel %vm1165, %v1154, %v880
        %v1189 = vsel %vm1165, %v1156, %v882
        %v1191 = vsel %vm1165, %v1158, %v884
        %v1193 = vsel %vm1165, %v1160, %v886
        %v1195 = vsel %vm1165, %v1162, %v888
        %v1197 = vsel %vm1165, %v1164, %v890
        %vm1198 = vcmask 228352
        %v1200 = vsel %vm1198, %v1167, %v924
        %v1202 = vsel %vm1198, %v1169, %v926
        %v1204 = vsel %vm1198, %v1171, %v928
        %v1206 = vsel %vm1198, %v1173, %v930
        %v1208 = vsel %vm1198, %v1175, %v932
        %v1210 = vsel %vm1198, %v1177, %v934
        %v1212 = vsel %vm1198, %v1179, %v936
        %v1214 = vsel %vm1198, %v1181, %v938
        %v1216 = vsel %vm1198, %v1183, %v940
        %v1218 = vsel %vm1198, %v1185, %v942
        %v1220 = vsel %vm1198, %v1187, %v944
        %v1222 = vsel %vm1198, %v1189, %v946
        %v1224 = vsel %vm1198, %v1191, %v948
        %v1226 = vsel %vm1198, %v1193, %v950
        %v1228 = vsel %vm1198, %v1195, %v952
        %v1230 = vsel %vm1198, %v1197, %v954
        %vm1231 = vcmask 261120
        %v1233 = vsel %vm1231, %v1200, %v969
        %v1235 = vsel %vm1231, %v1202, %v971
        %v1237 = vsel %vm1231, %v1204, %v973
        %v1239 = vsel %vm1231, %v1206, %v975
        %v1241 = vsel %vm1231, %v1208, %v977
        %v1243 = vsel %vm1231, %v1210, %v979
        %v1245 = vsel %vm1231, %v1212, %v981
        %v1247 = vsel %vm1231, %v1214, %v983
        %v1249 = vsel %vm1231, %v1216, %v985
        %v1251 = vsel %vm1231, %v1218, %v987
        %v1253 = vsel %vm1231, %v1220, %v989
        %v1255 = vsel %vm1231, %v1222, %v991
        %v1257 = vsel %vm1231, %v1224, %v993
        %v1259 = vsel %vm1231, %v1226, %v995
        %v1261 = vsel %vm1231, %v1228, %v997
        %v1263 = vsel %vm1231, %v1230, %v999
        %v1264 = vld [vmem:[%s1] sm:$0xf]
        %v1265 = vld [vmem:[%s1 + $0x4] sm:$0xf]
        %v1266 = vld [vmem:[%s1 + $0x8] sm:$0xf]
        %v1267 = vld [vmem:[%s1 + $0xc] sm:$0xf]
        %v1268 = vld [vmem:[%s1 + $0x10] sm:$0x3]
        %v1269 = vld [vmem:[%s2] sm:$0x1]
        %v1271 = vperm.slane %v1269, 0
        %v1278 = vunpack.c.l.b16 %v1264
        %v1279 = vunpack.c.l.b16 %v1265
        %v1280 = vunpack.c.l.b16 %v1266
        %v1281 = vunpack.c.l.b16 %v1267
        %v1282 = vunpack.c.l.b16 %v1268
        %v1283 = vpack.c.b16 %v1279, %v1278
        %v1284 = vpack.c.b16 %v1281, %v1280
        %v1285 = vpack.c.b16 %v1282, %v1282
        %vm1288 = vcmask 293888
        %v1289 = vsel %vm1288, %v1233, 0
        %v1291 = vsel %vm1288, %v1235, 0
        %v1293 = vsel %vm1288, %v1237, 0
        %v1295 = vsel %vm1288, %v1239, 0
        %v1297 = vsel %vm1288, %v1241, 0
        %v1299 = vsel %vm1288, %v1243, 0
        %v1301 = vsel %vm1288, %v1245, 0
        %v1303 = vsel %vm1288, %v1247, 0
        %v1305 = vsel %vm1288, %v1249, 0
        %v1307 = vsel %vm1288, %v1251, 0
        %v1309 = vsel %vm1288, %v1253, 0
        %v1311 = vsel %vm1288, %v1255, 0
        %v1313 = vsel %vm1288, %v1257, 0
        %v1315 = vsel %vm1288, %v1259, 0
        %v1317 = vsel %vm1288, %v1261, 0
        %v1319 = vsel %vm1288, %v1263, 0
        %vm1321 = vcmask 1041408
        %v1323 = vsel %vm1321, %v1285, 0
        %1325 = vmatpush.bf16.msra.mxu0 0
        %1326 = vmatpush.bf16.msra.mxu0 0
        %1327 = vmatpush.bf16.msra.mxu0 0
        %1328 = vmatpush.bf16.msra.mxu0 0
        %1329 = vmatpush.bf16.msra.mxu0 0
        %1330 = vmatpush.bf16.msra.mxu0 %v1323
        %1331 = vmatpush.bf16.msra.mxu0 %v1284
        %1332 = vmatpush.bf16.msra.mxu0 %v1283
        %1333 = vmatmul.bf16.gmra.mxu0 %v1289
        %v1334 = vpop.f32.mrf.mxu0
        %v1335 = vadd.f32 %v1271, %v1334
        %v1336 = vpop.f32.mrf.mxu0
        %v1337 = vadd.f32 %v1271, %v1336
        %1338 = vmatmul.bf16.gmra.mxu0 %v1291
        %v1339 = vpop.f32.mrf.mxu0
        %v1340 = vadd.f32 %v1271, %v1339
        %v1341 = vpop.f32.mrf.mxu0
        %v1342 = vadd.f32 %v1271, %v1341
        %1343 = vmatmul.bf16.gmra.mxu0 %v1293
        %v1344 = vpop.f32.mrf.mxu0
        %v1345 = vadd.f32 %v1271, %v1344
        %v1346 = vpop.f32.mrf.mxu0
        %v1347 = vadd.f32 %v1271, %v1346
        %1348 = vmatmul.bf16.gmra.mxu0 %v1295
        %v1349 = vpop.f32.mrf.mxu0
        %v1350 = vadd.f32 %v1271, %v1349
        %v1351 = vpop.f32.mrf.mxu0
        %v1352 = vadd.f32 %v1271, %v1351
        %1353 = vmatmul.bf16.gmra.mxu0 %v1297
        %v1354 = vpop.f32.mrf.mxu0
        %v1355 = vadd.f32 %v1271, %v1354
        %v1356 = vpop.f32.mrf.mxu0
        %v1357 = vadd.f32 %v1271, %v1356
        %1358 = vmatmul.bf16.gmra.mxu0 %v1299
        %v1359 = vpop.f32.mrf.mxu0
        %v1360 = vadd.f32 %v1271, %v1359
        %v1361 = vpop.f32.mrf.mxu0
        %v1362 = vadd.f32 %v1271, %v1361
        %1363 = vmatmul.bf16.gmra.mxu0 %v1301
        %v1364 = vpop.f32.mrf.mxu0
        %v1365 = vadd.f32 %v1271, %v1364
        %v1366 = vpop.f32.mrf.mxu0
        %v1367 = vadd.f32 %v1271, %v1366
        %1368 = vmatmul.bf16.gmra.mxu0 %v1303
        %v1369 = vpop.f32.mrf.mxu0
        %v1370 = vadd.f32 %v1271, %v1369
        %v1371 = vpop.f32.mrf.mxu0
        %v1372 = vadd.f32 %v1271, %v1371
        %1373 = vmatmul.bf16.gmra.mxu0 %v1305
        %v1374 = vpop.f32.mrf.mxu0
        %v1375 = vadd.f32 %v1271, %v1374
        %v1376 = vpop.f32.mrf.mxu0
        %v1377 = vadd.f32 %v1271, %v1376
        %1378 = vmatmul.bf16.gmra.mxu0 %v1307
        %v1379 = vpop.f32.mrf.mxu0
        %v1380 = vadd.f32 %v1271, %v1379
        %v1381 = vpop.f32.mrf.mxu0
        %v1382 = vadd.f32 %v1271, %v1381
        %1383 = vmatmul.bf16.gmra.mxu0 %v1309
        %v1384 = vpop.f32.mrf.mxu0
        %v1385 = vadd.f32 %v1271, %v1384
        %v1386 = vpop.f32.mrf.mxu0
        %v1387 = vadd.f32 %v1271, %v1386
        %1388 = vmatmul.bf16.gmra.mxu0 %v1311
        %v1389 = vpop.f32.mrf.mxu0
        %v1390 = vadd.f32 %v1271, %v1389
        %v1391 = vpop.f32.mrf.mxu0
        %v1392 = vadd.f32 %v1271, %v1391
        %1393 = vmatmul.bf16.gmra.mxu0 %v1313
        %v1394 = vpop.f32.mrf.mxu0
        %v1395 = vadd.f32 %v1271, %v1394
        %v1396 = vpop.f32.mrf.mxu0
        %v1397 = vadd.f32 %v1271, %v1396
        %1398 = vmatmul.bf16.gmra.mxu0 %v1315
        %v1399 = vpop.f32.mrf.mxu0
        %v1400 = vadd.f32 %v1271, %v1399
        %v1401 = vpop.f32.mrf.mxu0
        %v1402 = vadd.f32 %v1271, %v1401
        %1403 = vmatmul.bf16.gmra.mxu0 %v1317
        %v1404 = vpop.f32.mrf.mxu0
        %v1405 = vadd.f32 %v1271, %v1404
        %v1406 = vpop.f32.mrf.mxu0
        %v1407 = vadd.f32 %v1271, %v1406
        %1408 = vmatmul.bf16.gmra.mxu0 %v1319
        %v1409 = vpop.f32.mrf.mxu0
        %v1410 = vadd.f32 %v1271, %v1409
        %v1411 = vpop.f32.mrf.mxu0
        %v1412 = vadd.f32 %v1271, %v1411
        %1413 = vdwg.mxu0
        %v1414 = vmin.f32 %v1335, 20.0
        %v1415 = vmin.f32 %v1337, 20.0
        %v1416 = vmin.f32 %v1340, 20.0
        %v1417 = vmin.f32 %v1342, 20.0
        %v1418 = vmin.f32 %v1345, 20.0
        %v1419 = vmin.f32 %v1347, 20.0
        %v1420 = vmin.f32 %v1350, 20.0
        %v1421 = vmin.f32 %v1352, 20.0
        %v1422 = vmin.f32 %v1355, 20.0
        %v1423 = vmin.f32 %v1357, 20.0
        %v1424 = vmin.f32 %v1360, 20.0
        %v1425 = vmin.f32 %v1362, 20.0
        %v1426 = vmin.f32 %v1365, 20.0
        %v1427 = vmin.f32 %v1367, 20.0
        %v1428 = vmin.f32 %v1370, 20.0
        %v1429 = vmin.f32 %v1372, 20.0
        %v1430 = vmin.f32 %v1375, 20.0
        %v1431 = vmin.f32 %v1377, 20.0
        %v1432 = vmin.f32 %v1380, 20.0
        %v1433 = vmin.f32 %v1382, 20.0
        %v1434 = vmin.f32 %v1385, 20.0
        %v1435 = vmin.f32 %v1387, 20.0
        %v1436 = vmin.f32 %v1390, 20.0
        %v1437 = vmin.f32 %v1392, 20.0
        %v1438 = vmin.f32 %v1395, 20.0
        %v1439 = vmin.f32 %v1397, 20.0
        %v1440 = vmin.f32 %v1400, 20.0
        %v1441 = vmin.f32 %v1402, 20.0
        %v1442 = vmin.f32 %v1405, 20.0
        %v1443 = vmin.f32 %v1407, 20.0
        %v1444 = vmin.f32 %v1410, 20.0
        %v1445 = vmin.f32 %v1412, 20.0
        %v1446 = vmul.f32 %v1414, 1.442695
        %v1447 = vpow.pop %v1446
        %v1448 = vmul.f32 %v1415, 1.442695
        %v1449 = vpow.pop %v1448
        %v1450 = vmul.f32 %v1416, 1.442695
        %v1451 = vpow.pop %v1450
        %v1452 = vmul.f32 %v1417, 1.442695
        %v1453 = vpow.pop %v1452
        %v1454 = vmul.f32 %v1418, 1.442695
        %v1455 = vpow.pop %v1454
        %v1456 = vmul.f32 %v1419, 1.442695
        %v1457 = vpow.pop %v1456
        %v1458 = vmul.f32 %v1420, 1.442695
        %v1459 = vpow.pop %v1458
        %v1460 = vmul.f32 %v1421, 1.442695
        %v1461 = vpow.pop %v1460
        %v1462 = vmul.f32 %v1422, 1.442695
        %v1463 = vpow.pop %v1462
        %v1464 = vmul.f32 %v1423, 1.442695
        %v1465 = vpow.pop %v1464
        %v1466 = vmul.f32 %v1424, 1.442695
        %v1467 = vpow.pop %v1466
        %v1468 = vmul.f32 %v1425, 1.442695
        %v1469 = vpow.pop %v1468
        %v1470 = vmul.f32 %v1426, 1.442695
        %v1471 = vpow.pop %v1470
        %v1472 = vmul.f32 %v1427, 1.442695
        %v1473 = vpow.pop %v1472
        %v1474 = vmul.f32 %v1428, 1.442695
        %v1475 = vpow.pop %v1474
        %v1476 = vmul.f32 %v1429, 1.442695
        %v1477 = vpow.pop %v1476
        %v1478 = vmul.f32 %v1430, 1.442695
        %v1479 = vpow.pop %v1478
        %v1480 = vmul.f32 %v1431, 1.442695
        %v1481 = vpow.pop %v1480
        %v1482 = vmul.f32 %v1432, 1.442695
        %v1483 = vpow.pop %v1482
        %v1484 = vmul.f32 %v1433, 1.442695
        %v1485 = vpow.pop %v1484
        %v1486 = vmul.f32 %v1434, 1.442695
        %v1487 = vpow.pop %v1486
        %v1488 = vmul.f32 %v1435, 1.442695
        %v1489 = vpow.pop %v1488
        %v1490 = vmul.f32 %v1436, 1.442695
        %v1491 = vpow.pop %v1490
        %v1492 = vmul.f32 %v1437, 1.442695
        %v1493 = vpow.pop %v1492
        %v1494 = vmul.f32 %v1438, 1.442695
        %v1495 = vpow.pop %v1494
        %v1496 = vmul.f32 %v1439, 1.442695
        %v1497 = vpow.pop %v1496
        %v1498 = vmul.f32 %v1440, 1.442695
        %v1499 = vpow.pop %v1498
        %v1500 = vmul.f32 %v1441, 1.442695
        %v1501 = vpow.pop %v1500
        %v1502 = vmul.f32 %v1442, 1.442695
        %v1503 = vpow.pop %v1502
        %v1504 = vmul.f32 %v1443, 1.442695
        %v1505 = vpow.pop %v1504
        %v1506 = vmul.f32 %v1444, 1.442695
        %v1507 = vpow.pop %v1506
        %v1508 = vmul.f32 %v1445, 1.442695
        %v1509 = vpow.pop %v1508
        %v1510 = vadd.f32 %v1447, 1.0
        %v1511 = vadd.f32 %v1449, 1.0
        %v1512 = vadd.f32 %v1451, 1.0
        %v1513 = vadd.f32 %v1453, 1.0
        %v1514 = vadd.f32 %v1455, 1.0
        %v1515 = vadd.f32 %v1457, 1.0
        %v1516 = vadd.f32 %v1459, 1.0
        %v1517 = vadd.f32 %v1461, 1.0
        %v1518 = vadd.f32 %v1463, 1.0
        %v1519 = vadd.f32 %v1465, 1.0
        %v1520 = vadd.f32 %v1467, 1.0
        %v1521 = vadd.f32 %v1469, 1.0
        %v1522 = vadd.f32 %v1471, 1.0
        %v1523 = vadd.f32 %v1473, 1.0
        %v1524 = vadd.f32 %v1475, 1.0
        %v1525 = vadd.f32 %v1477, 1.0
        %v1526 = vadd.f32 %v1479, 1.0
        %v1527 = vadd.f32 %v1481, 1.0
        %v1528 = vadd.f32 %v1483, 1.0
        %v1529 = vadd.f32 %v1485, 1.0
        %v1530 = vadd.f32 %v1487, 1.0
        %v1531 = vadd.f32 %v1489, 1.0
        %v1532 = vadd.f32 %v1491, 1.0
        %v1533 = vadd.f32 %v1493, 1.0
        %v1534 = vadd.f32 %v1495, 1.0
        %v1535 = vadd.f32 %v1497, 1.0
        %v1536 = vadd.f32 %v1499, 1.0
        %v1537 = vadd.f32 %v1501, 1.0
        %v1538 = vadd.f32 %v1503, 1.0
        %v1539 = vadd.f32 %v1505, 1.0
        %v1540 = vadd.f32 %v1507, 1.0
        %v1541 = vadd.f32 %v1509, 1.0
        %v1542 = vmul.f32 %v1510, %v1510
        %v1543 = vmul.f32 %v1511, %v1511
        %v1544 = vmul.f32 %v1512, %v1512
        %v1545 = vmul.f32 %v1513, %v1513
        %v1546 = vmul.f32 %v1514, %v1514
        %v1547 = vmul.f32 %v1515, %v1515
        %v1548 = vmul.f32 %v1516, %v1516
        %v1549 = vmul.f32 %v1517, %v1517
        %v1550 = vmul.f32 %v1518, %v1518
        %v1551 = vmul.f32 %v1519, %v1519
        %v1552 = vmul.f32 %v1520, %v1520
        %v1553 = vmul.f32 %v1521, %v1521
        %v1554 = vmul.f32 %v1522, %v1522
        %v1555 = vmul.f32 %v1523, %v1523
        %v1556 = vmul.f32 %v1524, %v1524
        %v1557 = vmul.f32 %v1525, %v1525
        %v1558 = vmul.f32 %v1526, %v1526
        %v1559 = vmul.f32 %v1527, %v1527
        %v1560 = vmul.f32 %v1528, %v1528
        %v1561 = vmul.f32 %v1529, %v1529
        %v1562 = vmul.f32 %v1530, %v1530
        %v1563 = vmul.f32 %v1531, %v1531
        %v1564 = vmul.f32 %v1532, %v1532
        %v1565 = vmul.f32 %v1533, %v1533
        %v1566 = vmul.f32 %v1534, %v1534
        %v1567 = vmul.f32 %v1535, %v1535
        %v1568 = vmul.f32 %v1536, %v1536
        %v1569 = vmul.f32 %v1537, %v1537
        %v1570 = vmul.f32 %v1538, %v1538
        %v1571 = vmul.f32 %v1539, %v1539
        %v1572 = vmul.f32 %v1540, %v1540
        %v1573 = vmul.f32 %v1541, %v1541
        %v1574 = vadd.f32 %v1542, 1.0
        %v1575 = vadd.f32 %v1543, 1.0
        %v1576 = vadd.f32 %v1544, 1.0
        %v1577 = vadd.f32 %v1545, 1.0
        %v1578 = vadd.f32 %v1546, 1.0
        %v1579 = vadd.f32 %v1547, 1.0
        %v1580 = vadd.f32 %v1548, 1.0
        %v1581 = vadd.f32 %v1549, 1.0
        %v1582 = vadd.f32 %v1550, 1.0
        %v1583 = vadd.f32 %v1551, 1.0
        %v1584 = vadd.f32 %v1552, 1.0
        %v1585 = vadd.f32 %v1553, 1.0
        %v1586 = vadd.f32 %v1554, 1.0
        %v1587 = vadd.f32 %v1555, 1.0
        %v1588 = vadd.f32 %v1556, 1.0
        %v1589 = vadd.f32 %v1557, 1.0
        %v1590 = vadd.f32 %v1558, 1.0
        %v1591 = vadd.f32 %v1559, 1.0
        %v1592 = vadd.f32 %v1560, 1.0
        %v1593 = vadd.f32 %v1561, 1.0
        %v1594 = vadd.f32 %v1562, 1.0
        %v1595 = vadd.f32 %v1563, 1.0
        %v1596 = vadd.f32 %v1564, 1.0
        %v1597 = vadd.f32 %v1565, 1.0
        %v1598 = vadd.f32 %v1566, 1.0
        %v1599 = vadd.f32 %v1567, 1.0
        %v1600 = vadd.f32 %v1568, 1.0
        %v1601 = vadd.f32 %v1569, 1.0
        %v1602 = vadd.f32 %v1570, 1.0
        %v1603 = vadd.f32 %v1571, 1.0
        %v1604 = vadd.f32 %v1572, 1.0
        %v1605 = vadd.f32 %v1573, 1.0
        %v1606 = vrcp.pop %v1574
        %v1607 = vrcp.pop %v1575
        %v1608 = vrcp.pop %v1576
        %v1609 = vrcp.pop %v1577
        %v1610 = vrcp.pop %v1578
        %v1611 = vrcp.pop %v1579
        %v1612 = vrcp.pop %v1580
        %v1613 = vrcp.pop %v1581
        %v1614 = vrcp.pop %v1582
        %v1615 = vrcp.pop %v1583
        %v1616 = vrcp.pop %v1584
        %v1617 = vrcp.pop %v1585
        %v1618 = vrcp.pop %v1586
        %v1619 = vrcp.pop %v1587
        %v1620 = vrcp.pop %v1588
        %v1621 = vrcp.pop %v1589
        %v1622 = vrcp.pop %v1590
        %v1623 = vrcp.pop %v1591
        %v1624 = vrcp.pop %v1592
        %v1625 = vrcp.pop %v1593
        %v1626 = vrcp.pop %v1594
        %v1627 = vrcp.pop %v1595
        %v1628 = vrcp.pop %v1596
        %v1629 = vrcp.pop %v1597
        %v1630 = vrcp.pop %v1598
        %v1631 = vrcp.pop %v1599
        %v1632 = vrcp.pop %v1600
        %v1633 = vrcp.pop %v1601
        %v1634 = vrcp.pop %v1602
        %v1635 = vrcp.pop %v1603
        %v1636 = vrcp.pop %v1604
        %v1637 = vrcp.pop %v1605
        %v1638 = vmul.f32 %v1606, 2.0
        %v1639 = vmul.f32 %v1607, 2.0
        %v1640 = vmul.f32 %v1608, 2.0
        %v1641 = vmul.f32 %v1609, 2.0
        %v1642 = vmul.f32 %v1610, 2.0
        %v1643 = vmul.f32 %v1611, 2.0
        %v1644 = vmul.f32 %v1612, 2.0
        %v1645 = vmul.f32 %v1613, 2.0
        %v1646 = vmul.f32 %v1614, 2.0
        %v1647 = vmul.f32 %v1615, 2.0
        %v1648 = vmul.f32 %v1616, 2.0
        %v1649 = vmul.f32 %v1617, 2.0
        %v1650 = vmul.f32 %v1618, 2.0
        %v1651 = vmul.f32 %v1619, 2.0
        %v1652 = vmul.f32 %v1620, 2.0
        %v1653 = vmul.f32 %v1621, 2.0
        %v1654 = vmul.f32 %v1622, 2.0
        %v1655 = vmul.f32 %v1623, 2.0
        %v1656 = vmul.f32 %v1624, 2.0
        %v1657 = vmul.f32 %v1625, 2.0
        %v1658 = vmul.f32 %v1626, 2.0
        %v1659 = vmul.f32 %v1627, 2.0
        %v1660 = vmul.f32 %v1628, 2.0
        %v1661 = vmul.f32 %v1629, 2.0
        %v1662 = vmul.f32 %v1630, 2.0
        %v1663 = vmul.f32 %v1631, 2.0
        %v1664 = vmul.f32 %v1632, 2.0
        %v1665 = vmul.f32 %v1633, 2.0
        %v1666 = vmul.f32 %v1634, 2.0
        %v1667 = vmul.f32 %v1635, 2.0
        %v1668 = vmul.f32 %v1636, 2.0
        %v1669 = vmul.f32 %v1637, 2.0
        %v1670 = vsub.f32 1.0, %v1638
        %v1671 = vsub.f32 1.0, %v1639
        %v1672 = vsub.f32 1.0, %v1640
        %v1673 = vsub.f32 1.0, %v1641
        %v1674 = vsub.f32 1.0, %v1642
        %v1675 = vsub.f32 1.0, %v1643
        %v1676 = vsub.f32 1.0, %v1644
        %v1677 = vsub.f32 1.0, %v1645
        %v1678 = vsub.f32 1.0, %v1646
        %v1679 = vsub.f32 1.0, %v1647
        %v1680 = vsub.f32 1.0, %v1648
        %v1681 = vsub.f32 1.0, %v1649
        %v1682 = vsub.f32 1.0, %v1650
        %v1683 = vsub.f32 1.0, %v1651
        %v1684 = vsub.f32 1.0, %v1652
        %v1685 = vsub.f32 1.0, %v1653
        %v1686 = vsub.f32 1.0, %v1654
        %v1687 = vsub.f32 1.0, %v1655
        %v1688 = vsub.f32 1.0, %v1656
        %v1689 = vsub.f32 1.0, %v1657
        %v1690 = vsub.f32 1.0, %v1658
        %v1691 = vsub.f32 1.0, %v1659
        %v1692 = vsub.f32 1.0, %v1660
        %v1693 = vsub.f32 1.0, %v1661
        %v1694 = vsub.f32 1.0, %v1662
        %v1695 = vsub.f32 1.0, %v1663
        %v1696 = vsub.f32 1.0, %v1664
        %v1697 = vsub.f32 1.0, %v1665
        %v1698 = vsub.f32 1.0, %v1666
        %v1699 = vsub.f32 1.0, %v1667
        %v1700 = vsub.f32 1.0, %v1668
        %v1701 = vsub.f32 1.0, %v1669
        %v1702 = vmul.f32 %v1335, %v1670
        %v1703 = vmul.f32 %v1337, %v1671
        %v1704 = vmul.f32 %v1340, %v1672
        %v1705 = vmul.f32 %v1342, %v1673
        %v1706 = vmul.f32 %v1345, %v1674
        %v1707 = vmul.f32 %v1347, %v1675
        %v1708 = vmul.f32 %v1350, %v1676
        %v1709 = vmul.f32 %v1352, %v1677
        %v1710 = vmul.f32 %v1355, %v1678
        %v1711 = vmul.f32 %v1357, %v1679
        %v1712 = vmul.f32 %v1360, %v1680
        %v1713 = vmul.f32 %v1362, %v1681
        %v1714 = vmul.f32 %v1365, %v1682
        %v1715 = vmul.f32 %v1367, %v1683
        %v1716 = vmul.f32 %v1370, %v1684
        %v1717 = vmul.f32 %v1372, %v1685
        %v1718 = vmul.f32 %v1375, %v1686
        %v1719 = vmul.f32 %v1377, %v1687
        %v1720 = vmul.f32 %v1380, %v1688
        %v1721 = vmul.f32 %v1382, %v1689
        %v1722 = vmul.f32 %v1385, %v1690
        %v1723 = vmul.f32 %v1387, %v1691
        %v1724 = vmul.f32 %v1390, %v1692
        %v1725 = vmul.f32 %v1392, %v1693
        %v1726 = vmul.f32 %v1395, %v1694
        %v1727 = vmul.f32 %v1397, %v1695
        %v1728 = vmul.f32 %v1400, %v1696
        %v1729 = vmul.f32 %v1402, %v1697
        %v1730 = vmul.f32 %v1405, %v1698
        %v1731 = vmul.f32 %v1407, %v1699
        %v1732 = vmul.f32 %v1410, %v1700
        %v1733 = vmul.f32 %v1412, %v1701
        %v1734 = vpack.c.bf16 %v1702, %v1702
        %v1735 = vpack.c.bf16 %v1703, %v1703
        %v1736 = vpack.c.bf16 %v1704, %v1704
        %v1737 = vpack.c.bf16 %v1705, %v1705
        %v1738 = vpack.c.bf16 %v1706, %v1706
        %v1739 = vpack.c.bf16 %v1707, %v1707
        %v1740 = vpack.c.bf16 %v1708, %v1708
        %v1741 = vpack.c.bf16 %v1709, %v1709
        %v1742 = vpack.c.bf16 %v1710, %v1710
        %v1743 = vpack.c.bf16 %v1711, %v1711
        %v1744 = vpack.c.bf16 %v1712, %v1712
        %v1745 = vpack.c.bf16 %v1713, %v1713
        %v1746 = vpack.c.bf16 %v1714, %v1714
        %v1747 = vpack.c.bf16 %v1715, %v1715
        %v1748 = vpack.c.bf16 %v1716, %v1716
        %v1749 = vpack.c.bf16 %v1717, %v1717
        %v1750 = vpack.c.bf16 %v1718, %v1718
        %v1751 = vpack.c.bf16 %v1719, %v1719
        %v1752 = vpack.c.bf16 %v1720, %v1720
        %v1753 = vpack.c.bf16 %v1721, %v1721
        %v1754 = vpack.c.bf16 %v1722, %v1722
        %v1755 = vpack.c.bf16 %v1723, %v1723
        %v1756 = vpack.c.bf16 %v1724, %v1724
        %v1757 = vpack.c.bf16 %v1725, %v1725
        %v1758 = vpack.c.bf16 %v1726, %v1726
        %v1759 = vpack.c.bf16 %v1727, %v1727
        %v1760 = vpack.c.bf16 %v1728, %v1728
        %v1761 = vpack.c.bf16 %v1729, %v1729
        %v1762 = vpack.c.bf16 %v1730, %v1730
        %v1763 = vpack.c.bf16 %v1731, %v1731
        %v1764 = vpack.c.bf16 %v1732, %v1732
        %v1765 = vpack.c.bf16 %v1733, %v1733
        %1766 = vst [vmem:[%s122] sm:$0xf] %v1734
        %1767 = vst [vmem:[%s122 + $0x4] sm:$0xf] %v1735
        %1768 = vst [vmem:[%s122 + $0x8] sm:$0xf] %v1736
        %1769 = vst [vmem:[%s122 + $0xc] sm:$0xf] %v1737
        %1770 = vst [vmem:[%s122 + $0x10] sm:$0xf] %v1738
        %1771 = vst [vmem:[%s122 + $0x14] sm:$0xf] %v1739
        %1772 = vst [vmem:[%s122 + $0x18] sm:$0xf] %v1740
        %1773 = vst [vmem:[%s122 + $0x1c] sm:$0xf] %v1741
        %1774 = vst [vmem:[%s122 + $0x20] sm:$0xf] %v1742
        %1775 = vst [vmem:[%s122 + $0x24] sm:$0xf] %v1743
        %1776 = vst [vmem:[%s122 + $0x28] sm:$0xf] %v1744
        %1777 = vst [vmem:[%s122 + $0x2c] sm:$0xf] %v1745
        %1778 = vst [vmem:[%s122 + $0x30] sm:$0xf] %v1746
        %1779 = vst [vmem:[%s122 + $0x34] sm:$0xf] %v1747
        %1780 = vst [vmem:[%s122 + $0x38] sm:$0xf] %v1748
        %1781 = vst [vmem:[%s122 + $0x3c] sm:$0xf] %v1749
        %1782 = vst [vmem:[%s122 + $0x40] sm:$0xf] %v1750
        %1783 = vst [vmem:[%s122 + $0x44] sm:$0xf] %v1751
        %1784 = vst [vmem:[%s122 + $0x48] sm:$0xf] %v1752
        %1785 = vst [vmem:[%s122 + $0x4c] sm:$0xf] %v1753
        %1786 = vst [vmem:[%s122 + $0x50] sm:$0xf] %v1754
        %1787 = vst [vmem:[%s122 + $0x54] sm:$0xf] %v1755
        %1788 = vst [vmem:[%s122 + $0x58] sm:$0xf] %v1756
        %1789 = vst [vmem:[%s122 + $0x5c] sm:$0xf] %v1757
        %1790 = vst [vmem:[%s122 + $0x60] sm:$0xf] %v1758
        %1791 = vst [vmem:[%s122 + $0x64] sm:$0xf] %v1759
        %1792 = vst [vmem:[%s122 + $0x68] sm:$0xf] %v1760
        %1793 = vst [vmem:[%s122 + $0x6c] sm:$0xf] %v1761
        %1794 = vst [vmem:[%s122 + $0x70] sm:$0xf] %v1762
        %1795 = vst [vmem:[%s122 + $0x74] sm:$0xf] %v1763
        %1796 = vst [vmem:[%s122 + $0x78] sm:$0xf] %v1764
        %1797 = vst [vmem:[%s122 + $0x7c] sm:$0xf] %v1765
        %s1798 = sand.u32 %s67, 1
        %s1799 = scalar_lea.sflag [#allocation5], %s1798
        %s1800 = sand.u32 %s67, 1
        %s1801 = smul.addr %s1800, 128
        %s1802 = scalar_lea.vmem [#allocation4], %s1801
        // Predicated region
        $region51: #{tpu_custom_call.1} parent=27 // pred_check
          %p1803 = pneg %p77
        $region52: #{tpu_custom_call.1} parent=27 // pred_check_branch
          %1805 = sbr.rel (%p1803) target = $region54
        $region53: #{tpu_custom_call.1} parent=27 // pred_region
          %s1806 = smul.u32 32, %s17
          %1808 = vsyncadd %s1799, 0
          %s1809 = smul.addr %s1806, 4
          %s1810 = scalar_lea.hbm %s3, %s1809
          %s1811 = sshll.u32 %s1802, 4
          %s1812 = int_to_ptr.vmem [resolvable:$true] %s1811
          %s1813 = sshll.u32 %s1810, 4
          %s1814 = int_to_ptr.hbm [resolvable:$true] %s1813
          %1819 = dma.vmem_to_hbm [thread:$0]  %s1812, 2048, %s1814, %s1799, 64, 64, 4
        $region54: #{tpu_custom_call.1} parent=27 // pred_fallthru
          _
      $region28: #{tpu_custom_call.1} parent=5 // pred_fallthru
        _
      %p1820 = scmp.le.s32.totalorder 2, %s12
      // Predicated region
      $region55: #{tpu_custom_call.1} parent=5 // pred_check
        %p1821 = pneg %p1820
      $region56: #{tpu_custom_call.1} parent=5 // pred_check_branch
        %1823 = sbr.rel (%p1821) target = $region58
      $region57: #{tpu_custom_call.1} parent=5 // pred_region
        %s1824 = ssub.s32 %s12, 2
        // Predicated region
        $region59: #{tpu_custom_call.1} parent=57 // pred_check
          %p1825 = pneg %p83
        $region60: #{tpu_custom_call.1} parent=57 // pred_check_branch
          %1827 = sbr.rel (%p1825) target = $region62
        $region61: #{tpu_custom_call.1} parent=57 // pred_region
          %s1828 = sand.u32 %s68, 1
          %s1829 = scalar_lea.sflag [#allocation5], %s1828
          %s1830 = sand.u32 %s68, 1
          %s1831 = smul.addr %s1830, 128
          %s1832 = scalar_lea.vmem [#allocation4], %s1831
          %1834 = dma.done %s1829, 2048
        $region62: #{tpu_custom_call.1} parent=57 // pred_fallthru
          _
      $region58: #{tpu_custom_call.1} parent=5 // pred_fallthru
        _
    $region6: #{tpu_custom_call.1} parent=1 // loop_footer
      %s16 = sadd.s32 1, %s12
    $region7: #{tpu_custom_call.1} parent=1 // loop_footer_branch
      %11 = sbr.rel target = $region3
    $region8: #{tpu_custom_call.1} parent=1 // loop_exit
      _
    %1835 = vsyncpa [#allocation5], 1
    %s1836 = scalar_lea.sflag [#allocation5], 1
    %1837 = vsyncpa %s1836, 1
  %1838 = vsyncmov [#allocation3]
  %s1839 = vpop.sfrf %1838
  %p1840 = scmp.eq.s32.totalorder %s1839, 0
  %p1841 = pneg %p1840
  %1843 = shalt.err (%p1841)

</llo_original>
